<compile_context>
chip_gen: v5e
topology: v5e:2x2
jax: 0.10.0
libtpu: 0.0.40
codegen_flags: <defaults>
</compile_context>

<pallas_src>
import functools
import math

import jax
import jax.numpy as jnp
from jax.experimental import pallas as pl
from jax.experimental.pallas import tpu as pltpu


# ------------------------------ config --------------------------------------
class Config:
    vocab_size = 100
    hidden = 128          # BERT-base would be 768; scaled down, same structure
    num_layers = 2
    num_heads = 2
    head_dim = 64         # num_heads * head_dim == hidden
    intermediate = 512
    max_pos = 16
    type_vocab = 2
    eps = 1e-12
    num_classes = 2       # nn.Linear(output_dim, 2)


# --------------------------- in-kernel helpers -------------------------------
def _gelu_f32(y):
    # tanh-approximation GELU (BERT "gelu_new" variant), f32 math.
    c = math.sqrt(2.0 / math.pi)
    return 0.5 * y * (1.0 + jnp.tanh(c * (y + 0.044715 * y * y * y)))


def _layernorm_f32(h, gamma, beta, eps):
    mean = jnp.mean(h, axis=-1, keepdims=True)
    var = jnp.mean(jnp.square(h - mean), axis=-1, keepdims=True)
    return (h - mean) * jax.lax.rsqrt(var + eps) * gamma + beta


# --------------------------- fused encoder kernel -----------------------------
def _encoder_kernel(
        # constant (grid-invariant) inputs
        x_ref, mask_ref, embg_ref, embb_ref,
        # per-layer stacked inputs (leading dim indexed by grid step)
        wqkv_ref, bqkv_ref, wo_ref, bo_ref, ln1g_ref, ln1b_ref,
        wi_ref, bi_ref, wout_ref, bout_ref, ln2g_ref, ln2b_ref,
        # pooler + classifier (constant)
        poolw_ref, poolb_ref, clsw_ref, clsb_ref,
        # outputs / scratch
        logits_ref, x_sc,
        *, B, S, nH, D, eps):
    k = pl.program_id(0)
    H = nH * D
    M = B * S

    # ---- step 0: embedding LayerNorm into the persistent VMEM activation ----
    @pl.when(k == 0)
    def _():
        x_sc[...] = _layernorm_f32(x_ref[...].astype(jnp.float32),
                                   embg_ref[...], embb_ref[...], eps)

    x = x_sc[...]                                   # (M, H) f32, layer input
    x_bf = x.astype(jnp.bfloat16)

    # ---- fused QKV projection: one (H, 3H) matmul --------------------------
    qkv = jnp.dot(x_bf, wqkv_ref[0],
                  preferred_element_type=jnp.float32) + bqkv_ref[0]  # (M, 3H)

    # ---- attention: slice heads as 64-lane column windows (no transposes) ---
    scale = D ** -0.5
    mask = mask_ref[...]                            # (B, 1, S) additive, f32

    ctx_heads = []
    for h in range(nH):
        q = (qkv[:, h * D:(h + 1) * D] * scale).reshape(B, S, D)
        kk = qkv[:, H + h * D:H + (h + 1) * D].reshape(B, S, D)
        v = qkv[:, 2 * H + h * D:2 * H + (h + 1) * D].reshape(B, S, D)
        s = jnp.einsum("bqd,bkd->bqk",
                       q.astype(jnp.bfloat16), kk.astype(jnp.bfloat16),
                       preferred_element_type=jnp.float32)           # (B, S, S)
        s = s + mask
        mx = jnp.max(s, axis=-1, keepdims=True)
        p = jnp.exp(s - mx)
        p = p / jnp.sum(p, axis=-1, keepdims=True)                   # exact softmax
        o = jnp.einsum("bqk,bkd->bqd", p.astype(jnp.bfloat16),
                       v.astype(jnp.bfloat16),
                       preferred_element_type=jnp.float32)           # (B, S, D)
        ctx_heads.append(o.reshape(M, D))
    ctx = jnp.concatenate(ctx_heads, axis=-1)       # (M, H) lane-dense

    # ---- attention out-proj + residual + LayerNorm --------------------------
    h1 = jnp.dot(ctx.astype(jnp.bfloat16), wo_ref[0],
                 preferred_element_type=jnp.float32) + bo_ref[0] + x
    h1 = _layernorm_f32(h1, ln1g_ref[0], ln1b_ref[0], eps)

    # ---- FFN (up-proj + GELU + down-proj) + residual + LayerNorm ------------
    hi = jnp.dot(h1.astype(jnp.bfloat16), wi_ref[0],
                 preferred_element_type=jnp.float32) + bi_ref[0]     # (M, I)
    hi = _gelu_f32(hi)
    h2 = jnp.dot(hi.astype(jnp.bfloat16), wout_ref[0],
                 preferred_element_type=jnp.float32) + bout_ref[0] + h1
    h2 = _layernorm_f32(h2, ln2g_ref[0], ln2b_ref[0], eps)

    x_sc[...] = h2                                  # carry to next layer

    # ---- last step: pooler (dense + tanh) + 2-way classifier ----------------
    @pl.when(k == pl.num_programs(0) - 1)
    def _():
        # [CLS] token = row b*S of the (B*S, H) activation, for each batch b.
        cls_tok = jnp.concatenate([h2[b * S:b * S + 1, :] for b in range(B)],
                                  axis=0)                            # (B, H)
        pooled = jnp.tanh(
            jnp.dot(cls_tok.astype(jnp.bfloat16), poolw_ref[...],
                    preferred_element_type=jnp.float32) + poolb_ref[...])
        logits = jnp.dot(pooled.astype(jnp.bfloat16),
                         clsw_ref[...].astype(jnp.bfloat16),
                         preferred_element_type=jnp.float32) + clsb_ref[...]
        logits_ref[...] = logits.astype(logits_ref.dtype)


def encoder_pallas(x_emb, add_mask, p, cfg, B, S):
    """One pallas_call for the whole encoder + pooler + classifier."""
    H, I, C = cfg.hidden, cfg.intermediate, cfg.num_classes
    nH, D, L = cfg.num_heads, cfg.head_dim, cfg.num_layers
    M = B * S

    kernel = functools.partial(_encoder_kernel, B=B, S=S, nH=nH, D=D,
                               eps=cfg.eps)

    c2 = lambda k: (0, 0)
    c3 = lambda k: (0, 0, 0)
    lyr = lambda k: (k, 0, 0)

    return pl.pallas_call(
        kernel,
        out_shape=jax.ShapeDtypeStruct((B, C), jnp.float32),
        grid=(L,),
        in_specs=[
            pl.BlockSpec((M, H), c2),            # x_emb (raw embeddings)
            pl.BlockSpec((B, 1, S), c3),         # additive attention mask
            pl.BlockSpec((1, H), c2),            # emb_ln_g
            pl.BlockSpec((1, H), c2),            # emb_ln_b
            pl.BlockSpec((1, H, 3 * H), lyr),    # w_qkv  (bf16)
            pl.BlockSpec((1, 1, 3 * H), lyr),    # b_qkv
            pl.BlockSpec((1, H, H), lyr),        # wo     (bf16)
            pl.BlockSpec((1, 1, H), lyr),        # bo
            pl.BlockSpec((1, 1, H), lyr),        # ln1_g
            pl.BlockSpec((1, 1, H), lyr),        # ln1_b
            pl.BlockSpec((1, H, I), lyr),        # w_in   (bf16)
            pl.BlockSpec((1, 1, I), lyr),        # b_in
            pl.BlockSpec((1, I, H), lyr),        # w_out  (bf16)
            pl.BlockSpec((1, 1, H), lyr),        # b_out
            pl.BlockSpec((1, 1, H), lyr),        # ln2_g
            pl.BlockSpec((1, 1, H), lyr),        # ln2_b
            pl.BlockSpec((H, H), c2),            # pool_w (bf16)
            pl.BlockSpec((1, H), c2),            # pool_b
            pl.BlockSpec((H, C), c2),            # cls_w
            pl.BlockSpec((1, C), c2),            # cls_b
        ],
        out_specs=pl.BlockSpec((B, C), c2),
        scratch_shapes=[pltpu.VMEM((M, H), jnp.float32)],   # persistent x
        compiler_params=pltpu.CompilerParams(
            dimension_semantics=("arbitrary",)),
    )(x_emb, add_mask, p["emb_ln_g"], p["emb_ln_b"],
      p["w_qkv"], p["b_qkv"], p["wo"], p["bo"], p["ln1_g"], p["ln1_b"],
      p["w_in"], p["b_in"], p["w_out"], p["b_out"], p["ln2_g"], p["ln2_b"],
      p["pool_w"], p["pool_b"], p["cls_w"], p["cls_b"])


# ---------------------------- model (glue) -----------------------------------
def text_model_forward(params, input_ids, attention_mask, cfg):
    B, S = input_ids.shape
    H = cfg.hidden

    # Embedding gather + sum is XLA glue (no matmul); everything after is
    # one fused Pallas kernel.
    emb = (jnp.take(params["word_emb"], input_ids, axis=0)
           + params["pos_emb"][None, :S, :]
           + params["type_emb"][0][None, None, :])        # token_type_ids == 0
    x_emb = emb.reshape(B * S, H)

    add_mask = ((1.0 - attention_mask.astype(jnp.float32)) * -1e9
                ).reshape(B, 1, S)

    return encoder_pallas(x_emb, add_mask, params, cfg, B, S)   # (B, 2)


# ------------------------------ params ---------------------------------------
def init_params(key, cfg):
    L, H, I, C = cfg.num_layers, cfg.hidden, cfg.intermediate, cfg.num_classes
    keys = jax.random.split(key, 9)

    def dense(k, shape, dtype=jnp.float32):
        return (jax.random.normal(k, shape, jnp.float32) * 0.02).astype(dtype)

    return {
        # embeddings (f32)
        "word_emb": dense(keys[0], (cfg.vocab_size, H)),
        "pos_emb": dense(keys[1], (cfg.max_pos, H)),
        "type_emb": dense(keys[2], (cfg.type_vocab, H)),
        "emb_ln_g": jnp.ones((1, H), jnp.float32),
        "emb_ln_b": jnp.zeros((1, H), jnp.float32),
        # per-layer weights stacked along a leading axis; matmul weights bf16.
        "w_qkv": dense(keys[3], (L, H, 3 * H), jnp.bfloat16),
        "b_qkv": jnp.zeros((L, 1, 3 * H), jnp.float32),
        "wo": dense(keys[4], (L, H, H), jnp.bfloat16),
        "bo": jnp.zeros((L, 1, H), jnp.float32),
        "ln1_g": jnp.ones((L, 1, H), jnp.float32),
        "ln1_b": jnp.zeros((L, 1, H), jnp.float32),
        "w_in": dense(keys[5], (L, H, I), jnp.bfloat16),
        "b_in": jnp.zeros((L, 1, I), jnp.float32),
        "w_out": dense(keys[6], (L, I, H), jnp.bfloat16),
        "b_out": jnp.zeros((L, 1, H), jnp.float32),
        "ln2_g": jnp.ones((L, 1, H), jnp.float32),
        "ln2_b": jnp.zeros((L, 1, H), jnp.float32),
        # pooler + classifier
        "pool_w": dense(keys[7], (H, H), jnp.bfloat16),
        "pool_b": jnp.zeros((1, H), jnp.float32),
        "cls_w": dense(keys[8], (H, C)),                   # tiny, keep f32
        "cls_b": jnp.zeros((1, C), jnp.float32),
    }


# ------------------------------- main -----------------------------------------
if __name__ == "__main__":
    cfg = Config()
    key = jax.random.PRNGKey(0)
    pkey, ikey = jax.random.split(key)

    params = init_params(pkey, cfg)

    B, S = 2, 8
    input_ids = jax.random.randint(ikey, (B, S), 0, cfg.vocab_size,
                                   dtype=jnp.int32)
    attention_mask = jnp.ones((B, S), dtype=jnp.int32)
    attention_mask = attention_mask.at[1, 6:].set(0)   # pad last 2 tokens of ex 1

    fwd = jax.jit(functools.partial(text_model_forward, cfg=cfg))
    logits = fwd(params, input_ids, attention_mask)
    jax.block_until_ready(logits)

    assert logits.shape == (B, cfg.num_classes)
    assert bool(jnp.all(jnp.isfinite(logits)))
    print("KERNEL_OK")
</pallas_src>

<mosaic_0001>
module attributes {stable_mosaic.version = 11 : i64} {
  func.func @_encoder_kernel(%arg0: i32, %arg1: memref<16x128xf32, #tpu.memory_space<vmem>>, %arg2: memref<2x1x8xf32, #tpu.memory_space<vmem>>, %arg3: memref<1x128xf32, #tpu.memory_space<vmem>>, %arg4: memref<1x128xf32, #tpu.memory_space<vmem>>, %arg5: memref<1x128x384xbf16, #tpu.memory_space<vmem>>, %arg6: memref<1x1x384xf32, #tpu.memory_space<vmem>>, %arg7: memref<1x128x128xbf16, #tpu.memory_space<vmem>>, %arg8: memref<1x1x128xf32, #tpu.memory_space<vmem>>, %arg9: memref<1x1x128xf32, #tpu.memory_space<vmem>>, %arg10: memref<1x1x128xf32, #tpu.memory_space<vmem>>, %arg11: memref<1x128x512xbf16, #tpu.memory_space<vmem>>, %arg12: memref<1x1x512xf32, #tpu.memory_space<vmem>>, %arg13: memref<1x512x128xbf16, #tpu.memory_space<vmem>>, %arg14: memref<1x1x128xf32, #tpu.memory_space<vmem>>, %arg15: memref<1x1x128xf32, #tpu.memory_space<vmem>>, %arg16: memref<1x1x128xf32, #tpu.memory_space<vmem>>, %arg17: memref<128x128xbf16, #tpu.memory_space<vmem>>, %arg18: memref<1x128xf32, #tpu.memory_space<vmem>>, %arg19: memref<128x2xf32, #tpu.memory_space<vmem>>, %arg20: memref<1x2xf32, #tpu.memory_space<vmem>>, %arg21: memref<2x2xf32, #tpu.memory_space<vmem>>, %arg22: memref<16x128xf32, #tpu.memory_space<vmem>>) attributes {dimension_semantics = [#tpu.dimension_semantics<arbitrary>], iteration_bounds = array<i64: 2>, scalar_prefetch = 0 : i64, scratch_operands = 1 : i64, tpu.core_type = #tpu.core_type<tc>, window_params = [{pipeline_mode = #tpu.pipeline_mode<synchronous>, transform_indices = @transform_0, window_bounds = array<i64: 16, 128>}, {pipeline_mode = #tpu.pipeline_mode<synchronous>, transform_indices = @transform_1, window_bounds = array<i64: 2, 1, 8>}, {pipeline_mode = #tpu.pipeline_mode<synchronous>, transform_indices = @transform_2, window_bounds = array<i64: 1, 128>}, {pipeline_mode = #tpu.pipeline_mode<synchronous>, transform_indices = @transform_3, window_bounds = array<i64: 1, 128>}, {transform_indices = @transform_4, window_bounds = array<i64: 1, 128, 384>}, {transform_indices = @transform_5, window_bounds = array<i64: 1, 1, 384>}, {transform_indices = @transform_6, window_bounds = array<i64: 1, 128, 128>}, {transform_indices = @transform_7, window_bounds = array<i64: 1, 1, 128>}, {transform_indices = @transform_8, window_bounds = array<i64: 1, 1, 128>}, {transform_indices = @transform_9, window_bounds = array<i64: 1, 1, 128>}, {transform_indices = @transform_10, window_bounds = array<i64: 1, 128, 512>}, {transform_indices = @transform_11, window_bounds = array<i64: 1, 1, 512>}, {transform_indices = @transform_12, window_bounds = array<i64: 1, 512, 128>}, {transform_indices = @transform_13, window_bounds = array<i64: 1, 1, 128>}, {transform_indices = @transform_14, window_bounds = array<i64: 1, 1, 128>}, {transform_indices = @transform_15, window_bounds = array<i64: 1, 1, 128>}, {pipeline_mode = #tpu.pipeline_mode<synchronous>, transform_indices = @transform_16, window_bounds = array<i64: 128, 128>}, {pipeline_mode = #tpu.pipeline_mode<synchronous>, transform_indices = @transform_17, window_bounds = array<i64: 1, 128>}, {pipeline_mode = #tpu.pipeline_mode<synchronous>, transform_indices = @transform_18, window_bounds = array<i64: 128, 2>}, {pipeline_mode = #tpu.pipeline_mode<synchronous>, transform_indices = @transform_19, window_bounds = array<i64: 1, 2>}, {pipeline_mode = #tpu.pipeline_mode<synchronous>, transform_indices = @transform_20, window_bounds = array<i64: 2, 2>}]} {
    %c0_i32 = arith.constant 0 : i32
    %0 = arith.cmpi eq, %arg0, %c0_i32 : i32
    %1 = arith.extui %0 : i1 to i32
    %c0_i32_0 = arith.constant 0 : i32
    %2 = arith.cmpi ne, %1, %c0_i32_0 : i32
    scf.if %2 {
      %c0_71 = arith.constant 0 : index
      %c0_72 = arith.constant 0 : index
      %161 = vector.load %arg1[%c0_71, %c0_72] : memref<16x128xf32, #tpu.memory_space<vmem>>, vector<16x128xf32>
      %c0_73 = arith.constant 0 : index
      %c0_74 = arith.constant 0 : index
      %162 = vector.load %arg3[%c0_73, %c0_74] : memref<1x128xf32, #tpu.memory_space<vmem>>, vector<1x128xf32>
      %c0_75 = arith.constant 0 : index
      %c0_76 = arith.constant 0 : index
      %163 = vector.load %arg4[%c0_75, %c0_76] : memref<1x128xf32, #tpu.memory_space<vmem>>, vector<1x128xf32>
      %cst_77 = arith.constant dense<0.000000e+00> : vector<16xf32>
      %164 = vector.multi_reduction <add>, %161, %cst_77 [1] : vector<16x128xf32> to vector<16xf32>
      %165 = vector.shape_cast %164 : vector<16xf32> to vector<16x1xf32>
      %cst_78 = arith.constant 1.280000e+02 : f32
      %166 = vector.broadcast %cst_78 : f32 to vector<16x1xf32>
      %167 = arith.divf %165, %166 : vector<16x1xf32>
      %168 = vector.broadcast %167 : vector<16x1xf32> to vector<16x128xf32>
      %169 = arith.subf %161, %168 : vector<16x128xf32>
      %170 = arith.mulf %169, %169 : vector<16x128xf32>
      %cst_79 = arith.constant dense<0.000000e+00> : vector<16xf32>
      %171 = vector.multi_reduction <add>, %170, %cst_79 [1] : vector<16x128xf32> to vector<16xf32>
      %172 = vector.shape_cast %171 : vector<16xf32> to vector<16x1xf32>
      %cst_80 = arith.constant 1.280000e+02 : f32
      %173 = vector.broadcast %cst_80 : f32 to vector<16x1xf32>
      %174 = arith.divf %172, %173 : vector<16x1xf32>
      %175 = vector.broadcast %167 : vector<16x1xf32> to vector<16x128xf32>
      %176 = arith.subf %161, %175 : vector<16x128xf32>
      %cst_81 = arith.constant 9.99999996E-13 : f32
      %177 = vector.broadcast %cst_81 : f32 to vector<16x1xf32>
      %178 = arith.addf %174, %177 : vector<16x1xf32>
      %179 = math.rsqrt %178 : vector<16x1xf32>
      %180 = vector.broadcast %179 : vector<16x1xf32> to vector<16x128xf32>
      %181 = arith.mulf %176, %180 : vector<16x128xf32>
      %182 = vector.broadcast %162 : vector<1x128xf32> to vector<16x128xf32>
      %183 = arith.mulf %181, %182 : vector<16x128xf32>
      %184 = vector.broadcast %163 : vector<1x128xf32> to vector<16x128xf32>
      %185 = arith.addf %183, %184 : vector<16x128xf32>
      %c0_82 = arith.constant 0 : index
      %c0_83 = arith.constant 0 : index
      %186 = vector.load %arg22[%c0_82, %c0_83] : memref<16x128xf32, #tpu.memory_space<vmem>>, vector<16x128xf32>
      tpu.vector_store %arg22[%c0_82, %c0_83], %185 {strides = array<i32>} : memref<16x128xf32, #tpu.memory_space<vmem>>, vector<16x128xf32>,
    } else {
    }
    %c0 = arith.constant 0 : index
    %c0_1 = arith.constant 0 : index
    %3 = vector.load %arg22[%c0, %c0_1] : memref<16x128xf32, #tpu.memory_space<vmem>>, vector<16x128xf32>
    %4 = arith.truncf %3 : vector<16x128xf32> to vector<16x128xbf16>
    %c0_2 = arith.constant 0 : index
    %c0_3 = arith.constant 0 : index
    %c0_4 = arith.constant 0 : index
    %5 = vector.load %arg5[%c0_2, %c0_3, %c0_4] : memref<1x128x384xbf16, #tpu.memory_space<vmem>>, vector<1x128x384xbf16>
    %6 = vector.shape_cast %5 : vector<1x128x384xbf16> to vector<128x384xbf16>
    %cst = arith.constant dense<0.000000e+00> : vector<16x384xf32>
    %7 = tpu.matmul %4, %6, %cst {dimension_numbers = #tpu.dot_dimension_numbers<[1], [0], [0], [1], [0, 0, 1, 1], [], []>} : vector<16x128xbf16>, vector<128x384xbf16>, vector<16x384xf32> -> vector<16x384xf32>
    %c0_5 = arith.constant 0 : index
    %c0_6 = arith.constant 0 : index
    %c0_7 = arith.constant 0 : index
    %8 = vector.load %arg6[%c0_5, %c0_6, %c0_7] : memref<1x1x384xf32, #tpu.memory_space<vmem>>, vector<1x1x384xf32>
    %9 = vector.shape_cast %8 : vector<1x1x384xf32> to vector<1x384xf32>
    %10 = vector.broadcast %9 : vector<1x384xf32> to vector<16x384xf32>
    %11 = arith.addf %7, %10 : vector<16x384xf32>
    %c0_8 = arith.constant 0 : index
    %c0_9 = arith.constant 0 : index
    %c0_10 = arith.constant 0 : index
    %12 = vector.load %arg2[%c0_8, %c0_9, %c0_10] : memref<2x1x8xf32, #tpu.memory_space<vmem>>, vector<2x1x8xf32>
    %13 = vector.extract_strided_slice %11 {offsets = [0, 0], sizes = [16, 64], strides = [1, 1]} : vector<16x384xf32> to vector<16x64xf32>
    %cst_11 = arith.constant 1.250000e-01 : f32
    %14 = vector.broadcast %cst_11 : f32 to vector<16x64xf32>
    %15 = arith.mulf %13, %14 : vector<16x64xf32>
    %16 = vector.shape_cast %15 : vector<16x64xf32> to vector<2x8x64xf32>
    %17 = vector.extract_strided_slice %11 {offsets = [0, 128], sizes = [16, 64], strides = [1, 1]} : vector<16x384xf32> to vector<16x64xf32>
    %18 = vector.shape_cast %17 : vector<16x64xf32> to vector<2x8x64xf32>
    %19 = vector.extract_strided_slice %11 {offsets = [0, 256], sizes = [16, 64], strides = [1, 1]} : vector<16x384xf32> to vector<16x64xf32>
    %20 = vector.shape_cast %19 : vector<16x64xf32> to vector<2x8x64xf32>
    %21 = arith.truncf %16 : vector<2x8x64xf32> to vector<2x8x64xbf16>
    %22 = arith.truncf %18 : vector<2x8x64xf32> to vector<2x8x64xbf16>
    "tpu.trace_start"() <{level = 10 : i32, message = "bqd,bkd->bqk"}> : () -> ()
    %cst_12 = arith.constant dense<0.000000e+00> : vector<2x8x8xf32>
    %23 = tpu.matmul %21, %22, %cst_12 {dimension_numbers = #tpu.dot_dimension_numbers<[2], [2], [1], [1], [0, 0, 0, 1, 1, 1], [0], [0]>} : vector<2x8x64xbf16>, vector<2x8x64xbf16>, vector<2x8x8xf32> -> vector<2x8x8xf32>
    "tpu.trace_stop"() : () -> ()
    %24 = vector.broadcast %12 : vector<2x1x8xf32> to vector<2x8x8xf32>
    %25 = arith.addf %23, %24 : vector<2x8x8xf32>
    %cst_13 = arith.constant dense<0xFF800000> : vector<2x8xf32>
    %26 = vector.multi_reduction <maximumf>, %25, %cst_13 [2] : vector<2x8x8xf32> to vector<2x8xf32>
    %27 = vector.shape_cast %26 : vector<2x8xf32> to vector<2x8x1xf32>
    %28 = vector.broadcast %27 : vector<2x8x1xf32> to vector<2x8x8xf32>
    %29 = arith.subf %25, %28 : vector<2x8x8xf32>
    %30 = math.exp %29 : vector<2x8x8xf32>
    %cst_14 = arith.constant dense<0.000000e+00> : vector<2x8xf32>
    %31 = vector.multi_reduction <add>, %30, %cst_14 [2] : vector<2x8x8xf32> to vector<2x8xf32>
    %32 = vector.shape_cast %31 : vector<2x8xf32> to vector<2x8x1xf32>
    %33 = vector.broadcast %32 : vector<2x8x1xf32> to vector<2x8x8xf32>
    %34 = arith.divf %30, %33 : vector<2x8x8xf32>
    %35 = arith.truncf %34 : vector<2x8x8xf32> to vector<2x8x8xbf16>
    %36 = arith.truncf %20 : vector<2x8x64xf32> to vector<2x8x64xbf16>
    "tpu.trace_start"() <{level = 10 : i32, message = "bqk,bkd->bqd"}> : () -> ()
    %cst_15 = arith.constant dense<0.000000e+00> : vector<2x8x64xf32>
    %37 = tpu.matmul %35, %36, %cst_15 {dimension_numbers = #tpu.dot_dimension_numbers<[2], [1], [1], [2], [0, 0, 0, 1, 1, 2], [0], [0]>} : vector<2x8x8xbf16>, vector<2x8x64xbf16>, vector<2x8x64xf32> -> vector<2x8x64xf32>
    "tpu.trace_stop"() : () -> ()
    %38 = vector.shape_cast %37 : vector<2x8x64xf32> to vector<16x64xf32>
    %39 = vector.extract_strided_slice %11 {offsets = [0, 64], sizes = [16, 64], strides = [1, 1]} : vector<16x384xf32> to vector<16x64xf32>
    %cst_16 = arith.constant 1.250000e-01 : f32
    %40 = vector.broadcast %cst_16 : f32 to vector<16x64xf32>
    %41 = arith.mulf %39, %40 : vector<16x64xf32>
    %42 = vector.shape_cast %41 : vector<16x64xf32> to vector<2x8x64xf32>
    %43 = vector.extract_strided_slice %11 {offsets = [0, 192], sizes = [16, 64], strides = [1, 1]} : vector<16x384xf32> to vector<16x64xf32>
    %44 = vector.shape_cast %43 : vector<16x64xf32> to vector<2x8x64xf32>
    %45 = vector.extract_strided_slice %11 {offsets = [0, 320], sizes = [16, 64], strides = [1, 1]} : vector<16x384xf32> to vector<16x64xf32>
    %46 = vector.shape_cast %45 : vector<16x64xf32> to vector<2x8x64xf32>
    %47 = arith.truncf %42 : vector<2x8x64xf32> to vector<2x8x64xbf16>
    %48 = arith.truncf %44 : vector<2x8x64xf32> to vector<2x8x64xbf16>
    "tpu.trace_start"() <{level = 10 : i32, message = "bqd,bkd->bqk"}> : () -> ()
    %cst_17 = arith.constant dense<0.000000e+00> : vector<2x8x8xf32>
    %49 = tpu.matmul %47, %48, %cst_17 {dimension_numbers = #tpu.dot_dimension_numbers<[2], [2], [1], [1], [0, 0, 0, 1, 1, 1], [0], [0]>} : vector<2x8x64xbf16>, vector<2x8x64xbf16>, vector<2x8x8xf32> -> vector<2x8x8xf32>
    "tpu.trace_stop"() : () -> ()
    %50 = vector.broadcast %12 : vector<2x1x8xf32> to vector<2x8x8xf32>
    %51 = arith.addf %49, %50 : vector<2x8x8xf32>
    %cst_18 = arith.constant dense<0xFF800000> : vector<2x8xf32>
    %52 = vector.multi_reduction <maximumf>, %51, %cst_18 [2] : vector<2x8x8xf32> to vector<2x8xf32>
    %53 = vector.shape_cast %52 : vector<2x8xf32> to vector<2x8x1xf32>
    %54 = vector.broadcast %53 : vector<2x8x1xf32> to vector<2x8x8xf32>
    %55 = arith.subf %51, %54 : vector<2x8x8xf32>
    %56 = math.exp %55 : vector<2x8x8xf32>
    %cst_19 = arith.constant dense<0.000000e+00> : vector<2x8xf32>
    %57 = vector.multi_reduction <add>, %56, %cst_19 [2] : vector<2x8x8xf32> to vector<2x8xf32>
    %58 = vector.shape_cast %57 : vector<2x8xf32> to vector<2x8x1xf32>
    %59 = vector.broadcast %58 : vector<2x8x1xf32> to vector<2x8x8xf32>
    %60 = arith.divf %56, %59 : vector<2x8x8xf32>
    %61 = arith.truncf %60 : vector<2x8x8xf32> to vector<2x8x8xbf16>
    %62 = arith.truncf %46 : vector<2x8x64xf32> to vector<2x8x64xbf16>
    "tpu.trace_start"() <{level = 10 : i32, message = "bqk,bkd->bqd"}> : () -> ()
    %cst_20 = arith.constant dense<0.000000e+00> : vector<2x8x64xf32>
    %63 = tpu.matmul %61, %62, %cst_20 {dimension_numbers = #tpu.dot_dimension_numbers<[2], [1], [1], [2], [0, 0, 0, 1, 1, 2], [0], [0]>} : vector<2x8x8xbf16>, vector<2x8x64xbf16>, vector<2x8x64xf32> -> vector<2x8x64xf32>
    "tpu.trace_stop"() : () -> ()
    %64 = vector.shape_cast %63 : vector<2x8x64xf32> to vector<16x64xf32>
    %65 = tpu.concatenate %38, %64 in 1 : vector<16x64xf32>, vector<16x64xf32> -> vector<16x128xf32>
    %66 = arith.truncf %65 : vector<16x128xf32> to vector<16x128xbf16>
    %c0_21 = arith.constant 0 : index
    %c0_22 = arith.constant 0 : index
    %c0_23 = arith.constant 0 : index
    %67 = vector.load %arg7[%c0_21, %c0_22, %c0_23] : memref<1x128x128xbf16, #tpu.memory_space<vmem>>, vector<1x128x128xbf16>
    %68 = vector.shape_cast %67 : vector<1x128x128xbf16> to vector<128x128xbf16>
    %cst_24 = arith.constant dense<0.000000e+00> : vector<16x128xf32>
    %69 = tpu.matmul %66, %68, %cst_24 {dimension_numbers = #tpu.dot_dimension_numbers<[1], [0], [0], [1], [0, 0, 1, 1], [], []>} : vector<16x128xbf16>, vector<128x128xbf16>, vector<16x128xf32> -> vector<16x128xf32>
    %c0_25 = arith.constant 0 : index
    %c0_26 = arith.constant 0 : index
    %c0_27 = arith.constant 0 : index
    %70 = vector.load %arg8[%c0_25, %c0_26, %c0_27] : memref<1x1x128xf32, #tpu.memory_space<vmem>>, vector<1x1x128xf32>
    %71 = vector.shape_cast %70 : vector<1x1x128xf32> to vector<1x128xf32>
    %72 = vector.broadcast %71 : vector<1x128xf32> to vector<16x128xf32>
    %73 = arith.addf %69, %72 : vector<16x128xf32>
    %74 = arith.addf %73, %3 : vector<16x128xf32>
    %c0_28 = arith.constant 0 : index
    %c0_29 = arith.constant 0 : index
    %c0_30 = arith.constant 0 : index
    %75 = vector.load %arg9[%c0_28, %c0_29, %c0_30] : memref<1x1x128xf32, #tpu.memory_space<vmem>>, vector<1x1x128xf32>
    %76 = vector.shape_cast %75 : vector<1x1x128xf32> to vector<1x128xf32>
    %c0_31 = arith.constant 0 : index
    %c0_32 = arith.constant 0 : index
    %c0_33 = arith.constant 0 : index
    %77 = vector.load %arg10[%c0_31, %c0_32, %c0_33] : memref<1x1x128xf32, #tpu.memory_space<vmem>>, vector<1x1x128xf32>
    %78 = vector.shape_cast %77 : vector<1x1x128xf32> to vector<1x128xf32>
    %cst_34 = arith.constant dense<0.000000e+00> : vector<16xf32>
    %79 = vector.multi_reduction <add>, %74, %cst_34 [1] : vector<16x128xf32> to vector<16xf32>
    %80 = vector.shape_cast %79 : vector<16xf32> to vector<16x1xf32>
    %cst_35 = arith.constant 1.280000e+02 : f32
    %81 = vector.broadcast %cst_35 : f32 to vector<16x1xf32>
    %82 = arith.divf %80, %81 : vector<16x1xf32>
    %83 = vector.broadcast %82 : vector<16x1xf32> to vector<16x128xf32>
    %84 = arith.subf %74, %83 : vector<16x128xf32>
    %85 = arith.mulf %84, %84 : vector<16x128xf32>
    %cst_36 = arith.constant dense<0.000000e+00> : vector<16xf32>
    %86 = vector.multi_reduction <add>, %85, %cst_36 [1] : vector<16x128xf32> to vector<16xf32>
    %87 = vector.shape_cast %86 : vector<16xf32> to vector<16x1xf32>
    %cst_37 = arith.constant 1.280000e+02 : f32
    %88 = vector.broadcast %cst_37 : f32 to vector<16x1xf32>
    %89 = arith.divf %87, %88 : vector<16x1xf32>
    %90 = vector.broadcast %82 : vector<16x1xf32> to vector<16x128xf32>
    %91 = arith.subf %74, %90 : vector<16x128xf32>
    %cst_38 = arith.constant 9.99999996E-13 : f32
    %92 = vector.broadcast %cst_38 : f32 to vector<16x1xf32>
    %93 = arith.addf %89, %92 : vector<16x1xf32>
    %94 = math.rsqrt %93 : vector<16x1xf32>
    %95 = vector.broadcast %94 : vector<16x1xf32> to vector<16x128xf32>
    %96 = arith.mulf %91, %95 : vector<16x128xf32>
    %97 = vector.broadcast %76 : vector<1x128xf32> to vector<16x128xf32>
    %98 = arith.mulf %96, %97 : vector<16x128xf32>
    %99 = vector.broadcast %78 : vector<1x128xf32> to vector<16x128xf32>
    %100 = arith.addf %98, %99 : vector<16x128xf32>
    %101 = arith.truncf %100 : vector<16x128xf32> to vector<16x128xbf16>
    %c0_39 = arith.constant 0 : index
    %c0_40 = arith.constant 0 : index
    %c0_41 = arith.constant 0 : index
    %102 = vector.load %arg11[%c0_39, %c0_40, %c0_41] : memref<1x128x512xbf16, #tpu.memory_space<vmem>>, vector<1x128x512xbf16>
    %103 = vector.shape_cast %102 : vector<1x128x512xbf16> to vector<128x512xbf16>
    %cst_42 = arith.constant dense<0.000000e+00> : vector<16x512xf32>
    %104 = tpu.matmul %101, %103, %cst_42 {dimension_numbers = #tpu.dot_dimension_numbers<[1], [0], [0], [1], [0, 0, 1, 1], [], []>} : vector<16x128xbf16>, vector<128x512xbf16>, vector<16x512xf32> -> vector<16x512xf32>
    %c0_43 = arith.constant 0 : index
    %c0_44 = arith.constant 0 : index
    %c0_45 = arith.constant 0 : index
    %105 = vector.load %arg12[%c0_43, %c0_44, %c0_45] : memref<1x1x512xf32, #tpu.memory_space<vmem>>, vector<1x1x512xf32>
    %106 = vector.shape_cast %105 : vector<1x1x512xf32> to vector<1x512xf32>
    %107 = vector.broadcast %106 : vector<1x512xf32> to vector<16x512xf32>
    %108 = arith.addf %104, %107 : vector<16x512xf32>
    %cst_46 = arith.constant 5.000000e-01 : f32
    %109 = vector.broadcast %cst_46 : f32 to vector<16x512xf32>
    %110 = arith.mulf %109, %108 : vector<16x512xf32>
    %cst_47 = arith.constant 4.471500e-02 : f32
    %111 = vector.broadcast %cst_47 : f32 to vector<16x512xf32>
    %112 = arith.mulf %111, %108 : vector<16x512xf32>
    %113 = arith.mulf %112, %108 : vector<16x512xf32>
    %114 = arith.mulf %113, %108 : vector<16x512xf32>
    %115 = arith.addf %108, %114 : vector<16x512xf32>
    %cst_48 = arith.constant 0.797884583 : f32
    %116 = vector.broadcast %cst_48 : f32 to vector<16x512xf32>
    %117 = arith.mulf %116, %115 : vector<16x512xf32>
    %118 = math.tanh %117 : vector<16x512xf32>
    %cst_49 = arith.constant 1.000000e+00 : f32
    %119 = vector.broadcast %cst_49 : f32 to vector<16x512xf32>
    %120 = arith.addf %119, %118 : vector<16x512xf32>
    %121 = arith.mulf %110, %120 : vector<16x512xf32>
    %122 = arith.truncf %121 : vector<16x512xf32> to vector<16x512xbf16>
    %c0_50 = arith.constant 0 : index
    %c0_51 = arith.constant 0 : index
    %c0_52 = arith.constant 0 : index
    %123 = vector.load %arg13[%c0_50, %c0_51, %c0_52] : memref<1x512x128xbf16, #tpu.memory_space<vmem>>, vector<1x512x128xbf16>
    %124 = vector.shape_cast %123 : vector<1x512x128xbf16> to vector<512x128xbf16>
    %cst_53 = arith.constant dense<0.000000e+00> : vector<16x128xf32>
    %125 = tpu.matmul %122, %124, %cst_53 {dimension_numbers = #tpu.dot_dimension_numbers<[1], [0], [0], [1], [0, 0, 1, 1], [], []>} : vector<16x512xbf16>, vector<512x128xbf16>, vector<16x128xf32> -> vector<16x128xf32>
    %c0_54 = arith.constant 0 : index
    %c0_55 = arith.constant 0 : index
    %c0_56 = arith.constant 0 : index
    %126 = vector.load %arg14[%c0_54, %c0_55, %c0_56] : memref<1x1x128xf32, #tpu.memory_space<vmem>>, vector<1x1x128xf32>
    %127 = vector.shape_cast %126 : vector<1x1x128xf32> to vector<1x128xf32>
    %128 = vector.broadcast %127 : vector<1x128xf32> to vector<16x128xf32>
    %129 = arith.addf %125, %128 : vector<16x128xf32>
    %130 = arith.addf %129, %100 : vector<16x128xf32>
    %c0_57 = arith.constant 0 : index
    %c0_58 = arith.constant 0 : index
    %c0_59 = arith.constant 0 : index
    %131 = vector.load %arg15[%c0_57, %c0_58, %c0_59] : memref<1x1x128xf32, #tpu.memory_space<vmem>>, vector<1x1x128xf32>
    %132 = vector.shape_cast %131 : vector<1x1x128xf32> to vector<1x128xf32>
    %c0_60 = arith.constant 0 : index
    %c0_61 = arith.constant 0 : index
    %c0_62 = arith.constant 0 : index
    %133 = vector.load %arg16[%c0_60, %c0_61, %c0_62] : memref<1x1x128xf32, #tpu.memory_space<vmem>>, vector<1x1x128xf32>
    %134 = vector.shape_cast %133 : vector<1x1x128xf32> to vector<1x128xf32>
    %cst_63 = arith.constant dense<0.000000e+00> : vector<16xf32>
    %135 = vector.multi_reduction <add>, %130, %cst_63 [1] : vector<16x128xf32> to vector<16xf32>
    %136 = vector.shape_cast %135 : vector<16xf32> to vector<16x1xf32>
    %cst_64 = arith.constant 1.280000e+02 : f32
    %137 = vector.broadcast %cst_64 : f32 to vector<16x1xf32>
    %138 = arith.divf %136, %137 : vector<16x1xf32>
    %139 = vector.broadcast %138 : vector<16x1xf32> to vector<16x128xf32>
    %140 = arith.subf %130, %139 : vector<16x128xf32>
    %141 = arith.mulf %140, %140 : vector<16x128xf32>
    %cst_65 = arith.constant dense<0.000000e+00> : vector<16xf32>
    %142 = vector.multi_reduction <add>, %141, %cst_65 [1] : vector<16x128xf32> to vector<16xf32>
    %143 = vector.shape_cast %142 : vector<16xf32> to vector<16x1xf32>
    %cst_66 = arith.constant 1.280000e+02 : f32
    %144 = vector.broadcast %cst_66 : f32 to vector<16x1xf32>
    %145 = arith.divf %143, %144 : vector<16x1xf32>
    %146 = vector.broadcast %138 : vector<16x1xf32> to vector<16x128xf32>
    %147 = arith.subf %130, %146 : vector<16x128xf32>
    %cst_67 = arith.constant 9.99999996E-13 : f32
    %148 = vector.broadcast %cst_67 : f32 to vector<16x1xf32>
    %149 = arith.addf %145, %148 : vector<16x1xf32>
    %150 = math.rsqrt %149 : vector<16x1xf32>
    %151 = vector.broadcast %150 : vector<16x1xf32> to vector<16x128xf32>
    %152 = arith.mulf %147, %151 : vector<16x128xf32>
    %153 = vector.broadcast %132 : vector<1x128xf32> to vector<16x128xf32>
    %154 = arith.mulf %152, %153 : vector<16x128xf32>
    %155 = vector.broadcast %134 : vector<1x128xf32> to vector<16x128xf32>
    %156 = arith.addf %154, %155 : vector<16x128xf32>
    %c0_68 = arith.constant 0 : index
    %c0_69 = arith.constant 0 : index
    %157 = vector.load %arg22[%c0_68, %c0_69] : memref<16x128xf32, #tpu.memory_space<vmem>>, vector<16x128xf32>
    tpu.vector_store %arg22[%c0_68, %c0_69], %156 {strides = array<i32>} : memref<16x128xf32, #tpu.memory_space<vmem>>, vector<16x128xf32>,
    %c1_i32 = arith.constant 1 : i32
    %158 = arith.cmpi eq, %arg0, %c1_i32 : i32
    %159 = arith.extui %158 : i1 to i32
    %c0_i32_70 = arith.constant 0 : i32
    %160 = arith.cmpi ne, %159, %c0_i32_70 : i32
    scf.if %160 {
      %161 = vector.extract_strided_slice %156 {offsets = [0, 0], sizes = [1, 128], strides = [1, 1]} : vector<16x128xf32> to vector<1x128xf32>
      %162 = vector.extract_strided_slice %156 {offsets = [8, 0], sizes = [1, 128], strides = [1, 1]} : vector<16x128xf32> to vector<1x128xf32>
      %163 = tpu.concatenate %161, %162 in 0 : vector<1x128xf32>, vector<1x128xf32> -> vector<2x128xf32>
      %164 = arith.truncf %163 : vector<2x128xf32> to vector<2x128xbf16>
      %c0_71 = arith.constant 0 : index
      %c0_72 = arith.constant 0 : index
      %165 = vector.load %arg17[%c0_71, %c0_72] : memref<128x128xbf16, #tpu.memory_space<vmem>>, vector<128x128xbf16>
      %cst_73 = arith.constant dense<0.000000e+00> : vector<2x128xf32>
      %166 = tpu.matmul %164, %165, %cst_73 {dimension_numbers = #tpu.dot_dimension_numbers<[1], [0], [0], [1], [0, 0, 1, 1], [], []>} : vector<2x128xbf16>, vector<128x128xbf16>, vector<2x128xf32> -> vector<2x128xf32>
      %c0_74 = arith.constant 0 : index
      %c0_75 = arith.constant 0 : index
      %167 = vector.load %arg18[%c0_74, %c0_75] : memref<1x128xf32, #tpu.memory_space<vmem>>, vector<1x128xf32>
      %168 = vector.broadcast %167 : vector<1x128xf32> to vector<2x128xf32>
      %169 = arith.addf %166, %168 : vector<2x128xf32>
      %170 = math.tanh %169 : vector<2x128xf32>
      %171 = arith.truncf %170 : vector<2x128xf32> to vector<2x128xbf16>
      %c0_76 = arith.constant 0 : index
      %c0_77 = arith.constant 0 : index
      %172 = vector.load %arg19[%c0_76, %c0_77] : memref<128x2xf32, #tpu.memory_space<vmem>>, vector<128x2xf32>
      %173 = arith.truncf %172 : vector<128x2xf32> to vector<128x2xbf16>
      %cst_78 = arith.constant dense<0.000000e+00> : vector<2x2xf32>
      %174 = tpu.matmul %171, %173, %cst_78 {dimension_numbers = #tpu.dot_dimension_numbers<[1], [0], [0], [1], [0, 0, 1, 1], [], []>} : vector<2x128xbf16>, vector<128x2xbf16>, vector<2x2xf32> -> vector<2x2xf32>
      %c0_79 = arith.constant 0 : index
      %c0_80 = arith.constant 0 : index
      %175 = vector.load %arg20[%c0_79, %c0_80] : memref<1x2xf32, #tpu.memory_space<vmem>>, vector<1x2xf32>
      %176 = vector.broadcast %175 : vector<1x2xf32> to vector<2x2xf32>
      %177 = arith.addf %174, %176 : vector<2x2xf32>
      %c0_81 = arith.constant 0 : index
      %c0_82 = arith.constant 0 : index
      %178 = vector.load %arg21[%c0_81, %c0_82] : memref<2x2xf32, #tpu.memory_space<vmem>>, vector<2x2xf32>
      tpu.vector_store %arg21[%c0_81, %c0_82], %177 {strides = array<i32>} : memref<2x2xf32, #tpu.memory_space<vmem>>, vector<2x2xf32>,
    } else {
    }
    return
  }
  func.func @transform_0(%arg0: i32) -> (i32, i32) {
    %c0_i32 = arith.constant 0 : i32
    %c0_i32_0 = arith.constant 0 : i32
    %c0_i32_1 = arith.constant 0 : i32
    return %c0_i32, %c0_i32_0 : i32, i32
  }
  func.func @transform_1(%arg0: i32) -> (i32, i32, i32) {
    %c0_i32 = arith.constant 0 : i32
    %c0_i32_0 = arith.constant 0 : i32
    %c0_i32_1 = arith.constant 0 : i32
    %c0_i32_2 = arith.constant 0 : i32
    return %c0_i32, %c0_i32_0, %c0_i32_1 : i32, i32, i32
  }
  func.func @transform_2(%arg0: i32) -> (i32, i32) {
    %c0_i32 = arith.constant 0 : i32
    %c0_i32_0 = arith.constant 0 : i32
    %c0_i32_1 = arith.constant 0 : i32
    return %c0_i32, %c0_i32_0 : i32, i32
  }
  func.func @transform_3(%arg0: i32) -> (i32, i32) {
    %c0_i32 = arith.constant 0 : i32
    %c0_i32_0 = arith.constant 0 : i32
    %c0_i32_1 = arith.constant 0 : i32
    return %c0_i32, %c0_i32_0 : i32, i32
  }
  func.func @transform_4(%arg0: i32) -> (i32, i32, i32) {
    %c0_i32 = arith.constant 0 : i32
    %c0_i32_0 = arith.constant 0 : i32
    %c0_i32_1 = arith.constant 0 : i32
    return %arg0, %c0_i32, %c0_i32_0 : i32, i32, i32
  }
  func.func @transform_5(%arg0: i32) -> (i32, i32, i32) {
    %c0_i32 = arith.constant 0 : i32
    %c0_i32_0 = arith.constant 0 : i32
    %c0_i32_1 = arith.constant 0 : i32
    return %arg0, %c0_i32, %c0_i32_0 : i32, i32, i32
  }
  func.func @transform_6(%arg0: i32) -> (i32, i32, i32) {
    %c0_i32 = arith.constant 0 : i32
    %c0_i32_0 = arith.constant 0 : i32
    %c0_i32_1 = arith.constant 0 : i32
    return %arg0, %c0_i32, %c0_i32_0 : i32, i32, i32
  }
  func.func @transform_7(%arg0: i32) -> (i32, i32, i32) {
    %c0_i32 = arith.constant 0 : i32
    %c0_i32_0 = arith.constant 0 : i32
    %c0_i32_1 = arith.constant 0 : i32
    return %arg0, %c0_i32, %c0_i32_0 : i32, i32, i32
  }
  func.func @transform_8(%arg0: i32) -> (i32, i32, i32) {
    %c0_i32 = arith.constant 0 : i32
    %c0_i32_0 = arith.constant 0 : i32
    %c0_i32_1 = arith.constant 0 : i32
    return %arg0, %c0_i32, %c0_i32_0 : i32, i32, i32
  }
  func.func @transform_9(%arg0: i32) -> (i32, i32, i32) {
    %c0_i32 = arith.constant 0 : i32
    %c0_i32_0 = arith.constant 0 : i32
    %c0_i32_1 = arith.constant 0 : i32
    return %arg0, %c0_i32, %c0_i32_0 : i32, i32, i32
  }
  func.func @transform_10(%arg0: i32) -> (i32, i32, i32) {
    %c0_i32 = arith.constant 0 : i32
    %c0_i32_0 = arith.constant 0 : i32
    %c0_i32_1 = arith.constant 0 : i32
    return %arg0, %c0_i32, %c0_i32_0 : i32, i32, i32
  }
  func.func @transform_11(%arg0: i32) -> (i32, i32, i32) {
    %c0_i32 = arith.constant 0 : i32
    %c0_i32_0 = arith.constant 0 : i32
    %c0_i32_1 = arith.constant 0 : i32
    return %arg0, %c0_i32, %c0_i32_0 : i32, i32, i32
  }
  func.func @transform_12(%arg0: i32) -> (i32, i32, i32) {
    %c0_i32 = arith.constant 0 : i32
    %c0_i32_0 = arith.constant 0 : i32
    %c0_i32_1 = arith.constant 0 : i32
    return %arg0, %c0_i32, %c0_i32_0 : i32, i32, i32
  }
  func.func @transform_13(%arg0: i32) -> (i32, i32, i32) {
    %c0_i32 = arith.constant 0 : i32
    %c0_i32_0 = arith.constant 0 : i32
    %c0_i32_1 = arith.constant 0 : i32
    return %arg0, %c0_i32, %c0_i32_0 : i32, i32, i32
  }
  func.func @transform_14(%arg0: i32) -> (i32, i32, i32) {
    %c0_i32 = arith.constant 0 : i32
    %c0_i32_0 = arith.constant 0 : i32
    %c0_i32_1 = arith.constant 0 : i32
    return %arg0, %c0_i32, %c0_i32_0 : i32, i32, i32
  }
  func.func @transform_15(%arg0: i32) -> (i32, i32, i32) {
    %c0_i32 = arith.constant 0 : i32
    %c0_i32_0 = arith.constant 0 : i32
    %c0_i32_1 = arith.constant 0 : i32
    return %arg0, %c0_i32, %c0_i32_0 : i32, i32, i32
  }
  func.func @transform_16(%arg0: i32) -> (i32, i32) {
    %c0_i32 = arith.constant 0 : i32
    %c0_i32_0 = arith.constant 0 : i32
    %c0_i32_1 = arith.constant 0 : i32
    return %c0_i32, %c0_i32_0 : i32, i32
  }
  func.func @transform_17(%arg0: i32) -> (i32, i32) {
    %c0_i32 = arith.constant 0 : i32
    %c0_i32_0 = arith.constant 0 : i32
    %c0_i32_1 = arith.constant 0 : i32
    return %c0_i32, %c0_i32_0 : i32, i32
  }
  func.func @transform_18(%arg0: i32) -> (i32, i32) {
    %c0_i32 = arith.constant 0 : i32
    %c0_i32_0 = arith.constant 0 : i32
    %c0_i32_1 = arith.constant 0 : i32
    return %c0_i32, %c0_i32_0 : i32, i32
  }
  func.func @transform_19(%arg0: i32) -> (i32, i32) {
    %c0_i32 = arith.constant 0 : i32
    %c0_i32_0 = arith.constant 0 : i32
    %c0_i32_1 = arith.constant 0 : i32
    return %c0_i32, %c0_i32_0 : i32, i32
  }
  func.func @transform_20(%arg0: i32) -> (i32, i32) {
    %c0_i32 = arith.constant 0 : i32
    %c0_i32_0 = arith.constant 0 : i32
    %c0_i32_1 = arith.constant 0 : i32
    return %c0_i32, %c0_i32_0 : i32, i32
  }
}

</mosaic_0001>

<llo_original>
// kernel: text_model_forward.1
$region0: #{text_model_forward.1}
  #allocation0 [shape = 'u32[]', space=smem, size = 0x4, offset = 0x4, fixed_abs, tag = 'smem constant byte address 0x4 - core index']
  #allocation1 [shape = 'u32[72,128]{1,0:T(1,128)}', space=vmem, size = 0x9000, scoped, tag = 'internal scratch']
  #allocation2 [shape = 'f32[16,128]{1,0:T(8,128)}', space=vmem, size = 0x2000, scoped, tag = 'scratch operand']
  %s0 = inlined_call_operand.vmem [shape: f32[16,128], index: 0, kind: input, shape index: {}]
  %s1 = inlined_call_operand.vmem [shape: f32[2,1,8], index: 1, kind: input, shape index: {}]
  %s2 = inlined_call_operand.vmem [shape: f32[1,128], index: 2, kind: input, shape index: {}]
  %s3 = inlined_call_operand.vmem [shape: f32[1,128], index: 3, kind: input, shape index: {}]
  %s4 = inlined_call_operand.hbm [shape: bf16[2,128,384], index: 4, kind: input, shape index: {}]
  %s5 = inlined_call_operand.vmem [shape: f32[2,1,384], index: 5, kind: input, shape index: {}]
  %s6 = inlined_call_operand.vmem [shape: bf16[2,128,128], index: 6, kind: input, shape index: {}]
  %s7 = inlined_call_operand.vmem [shape: f32[2,1,128], index: 7, kind: input, shape index: {}]
  %s8 = inlined_call_operand.vmem [shape: f32[2,1,128], index: 8, kind: input, shape index: {}]
  %s9 = inlined_call_operand.vmem [shape: f32[2,1,128], index: 9, kind: input, shape index: {}]
  %s10 = inlined_call_operand.hbm [shape: bf16[2,128,512], index: 10, kind: input, shape index: {}]
  %s11 = inlined_call_operand.vmem [shape: f32[2,1,512], index: 11, kind: input, shape index: {}]
  %s12 = inlined_call_operand.hbm [shape: bf16[2,512,128], index: 12, kind: input, shape index: {}]
  %s13 = inlined_call_operand.vmem [shape: f32[2,1,128], index: 13, kind: input, shape index: {}]
  %s14 = inlined_call_operand.vmem [shape: f32[2,1,128], index: 14, kind: input, shape index: {}]
  %s15 = inlined_call_operand.vmem [shape: f32[2,1,128], index: 15, kind: input, shape index: {}]
  %s16 = inlined_call_operand.vmem [shape: bf16[128,128], index: 16, kind: input, shape index: {}]
  %s17 = inlined_call_operand.vmem [shape: f32[1,128], index: 17, kind: input, shape index: {}]
  %s18 = inlined_call_operand.vmem [shape: f32[128,2], index: 18, kind: input, shape index: {}]
  %s19 = inlined_call_operand.vmem [shape: f32[1,2], index: 19, kind: input, shape index: {}]
  %s20 = inlined_call_operand.hbm [shape: f32[2,2], index: 20, kind: output, shape index: {}]
  %s21 = sld [smem:[#allocation0]]
  $region133: #{text_model_forward.1} parent=0
    _
  %s23 = ssub.s32 1, %s21
  %s24 = scalar_select 0, %s23, %s21
  $region1: #{text_model_forward.1} parent=0
    #allocation3 [shape = 'u8[196608]{0}', space=vmem, size = 0x30000, scoped, tag = 'input window, operand 4']
    #allocation4 [shape = 's32[2]{0}', space=sflag, size = 0x8, scoped, tag = 'scoped memory for text_model_forward.1']
    #allocation5 [shape = 's32[2]{0}', space=sflag, size = 0x8, scoped, tag = 'scoped memory for text_model_forward.1']
    #allocation6 [shape = 'u8[262144]{0}', space=vmem, size = 0x40000, scoped, tag = 'input window, operand 10']
    #allocation7 [shape = 's32[2]{0}', space=sflag, size = 0x8, scoped, tag = 'scoped memory for text_model_forward.1']
    #allocation8 [shape = 'u8[262144]{0}', space=vmem, size = 0x40000, scoped, tag = 'input window, operand 12']
    #allocation9 [shape = 'u8[1024]{0}', space=vmem, size = 0x400, scoped, tag = 'output window, operand 0, single buffered']
    %25 = vsyncpa [#allocation4], 0
    %s26 = scalar_lea.sflag [#allocation4], 1
    %27 = vsyncpa %s26, 0
    %28 = vsyncpa [#allocation7], 0
    %s29 = scalar_lea.sflag [#allocation7], 1
    %30 = vsyncpa %s29, 0
    %31 = vsyncpa [#allocation5], 0
    loop: start=0, step=1, limit=4
    $region2: #{text_model_forward.1} parent=1 // loop_pre_header
      _
    $region3: #{text_model_forward.1} parent=1 // loop_header
      %s33 = sphi 0, %s37
      %p34 = scmp.ge.s32.totalorder %s33, 4
      %s41 = sphi 0, %s41
      %s43 = sphi 0, %s41
      %s44 = sphi 0, %s43
      %s58 = sphi 0, %s44
      %s62 = sphi 0, %s62
      %s64 = sphi 0, %s62
      %s65 = sphi 0, %s64
      %s79 = sphi 0, %s65
      %s83 = sphi 0, %s83
      %s85 = sphi 0, %s83
      %s86 = sphi 0, %s85
      %s100 = sphi 0, %s86
      %s104 = sphi 0, %s104
      %s106 = sphi 0, %s104
      %s107 = sphi 0, %s106
      %s121 = sphi 0, %s107
      %s127 = sphi 0, %s129
      %s130 = sphi 0, %s127
      %s131 = sphi 0, %s130
      %s147 = sphi 0, %s131
      %s153 = sphi 0, %s155
      %s156 = sphi 0, %s153
      %s157 = sphi 0, %s156
      %s173 = sphi 0, %s157
      %s179 = sphi 0, %s181
      %s182 = sphi 0, %s179
      %s183 = sphi 0, %s182
      %s199 = sphi 0, %s183
      %s205 = sphi 0, %s207
      %s208 = sphi 0, %s205
      %s209 = sphi 0, %s208
      %s225 = sphi 0, %s209
      %s231 = sphi 0, %s233
      %s234 = sphi 0, %s231
      %s235 = sphi 0, %s234
      %s251 = sphi 0, %s235
      %s257 = sphi 0, %s259
      %s260 = sphi 0, %s257
      %s261 = sphi 0, %s260
      %s277 = sphi 0, %s261
      %s283 = sphi 0, %s285
      %s286 = sphi 0, %s283
      %s287 = sphi 0, %s286
      %s303 = sphi 0, %s287
      %s309 = sphi 0, %s311
      %s312 = sphi 0, %s309
      %s313 = sphi 0, %s312
      %s329 = sphi 0, %s313
      %s335 = sphi 0, %s337
      %s338 = sphi 0, %s335
      %s339 = sphi 0, %s338
      %s355 = sphi 0, %s339
      %s361 = sphi 0, %s363
      %s364 = sphi 0, %s361
      %s365 = sphi 0, %s364
      %s381 = sphi 0, %s365
      %s387 = sphi 0, %s389
      %s390 = sphi 0, %s387
      %s391 = sphi 0, %s390
      %s407 = sphi 0, %s391
      %s413 = sphi 0, %s415
      %s416 = sphi 0, %s413
      %s417 = sphi 0, %s416
      %s433 = sphi 0, %s417
      %s437 = sphi 0, %s437
      %s439 = sphi 0, %s437
      %s440 = sphi 0, %s439
      %s454 = sphi 0, %s440
      %s458 = sphi 0, %s458
      %s460 = sphi 0, %s458
      %s461 = sphi 0, %s460
      %s475 = sphi 0, %s461
      %s479 = sphi 0, %s479
      %s481 = sphi 0, %s479
      %s482 = sphi 0, %s481
      %s496 = sphi 0, %s482
      %s500 = sphi 0, %s500
      %s502 = sphi 0, %s500
      %s503 = sphi 0, %s502
      %s517 = sphi 0, %s503
      %s521 = sphi 0, %s521
      %s523 = sphi 0, %s521
      %s524 = sphi 0, %s523
      %s538 = sphi 0, %s524
    $region4: #{text_model_forward.1} parent=1 // loop_header_branch
      %36 = sbr.rel (%p34) target = $region8
    $region5: #{text_model_forward.1} parent=1 // loop_body
      %s38 = ssub.s32 %s33, 1
      %s39 = ssub.s32 %s33, 2
      %s40 = sadd.s32 %s33, 1
      %s42 = sadd.s32 %s41, 1
      %p45 = scmp.eq.s32.totalorder %s33, 1
      %p46 = scmp.ne.s32.totalorder %s41, %s43
      %p47 = scmp.eq.s32.totalorder %s33, 0
      %p48 = por %p46, %p47
      %p49 = scmp.ne.s32.totalorder %s41, %s43
      %p50 = scmp.eq.s32.totalorder %s38, 1
      %p51 = por %p49, %p50
      %p52 = scmp.ne.s32.totalorder %s43, %s44
      %p53 = scmp.eq.s32.totalorder %s38, 0
      %p54 = por %p52, %p53
      %p55 = scmp.ne.s32.totalorder %s43, %s44
      %p56 = scmp.eq.s32.totalorder %s39, 1
      %p57 = por %p55, %p56
      %p59 = scmp.ne.s32.totalorder %s44, %s58
      %p60 = scmp.eq.s32.totalorder %s39, 0
      %p61 = por %p59, %p60
      %s63 = sadd.s32 %s62, 1
      %p66 = scmp.eq.s32.totalorder %s33, 1
      %p67 = scmp.ne.s32.totalorder %s62, %s64
      %p68 = scmp.eq.s32.totalorder %s33, 0
      %p69 = por %p67, %p68
      %p70 = scmp.ne.s32.totalorder %s62, %s64
      %p71 = scmp.eq.s32.totalorder %s38, 1
      %p72 = por %p70, %p71
      %p73 = scmp.ne.s32.totalorder %s64, %s65
      %p74 = scmp.eq.s32.totalorder %s38, 0
      %p75 = por %p73, %p74
      %p76 = scmp.ne.s32.totalorder %s64, %s65
      %p77 = scmp.eq.s32.totalorder %s39, 1
      %p78 = por %p76, %p77
      %p80 = scmp.ne.s32.totalorder %s65, %s79
      %p81 = scmp.eq.s32.totalorder %s39, 0
      %p82 = por %p80, %p81
      %s84 = sadd.s32 %s83, 1
      %p87 = scmp.eq.s32.totalorder %s33, 1
      %p88 = scmp.ne.s32.totalorder %s83, %s85
      %p89 = scmp.eq.s32.totalorder %s33, 0
      %p90 = por %p88, %p89
      %p91 = scmp.ne.s32.totalorder %s83, %s85
      %p92 = scmp.eq.s32.totalorder %s38, 1
      %p93 = por %p91, %p92
      %p94 = scmp.ne.s32.totalorder %s85, %s86
      %p95 = scmp.eq.s32.totalorder %s38, 0
      %p96 = por %p94, %p95
      %p97 = scmp.ne.s32.totalorder %s85, %s86
      %p98 = scmp.eq.s32.totalorder %s39, 1
      %p99 = por %p97, %p98
      %p101 = scmp.ne.s32.totalorder %s86, %s100
      %p102 = scmp.eq.s32.totalorder %s39, 0
      %p103 = por %p101, %p102
      %s105 = sadd.s32 %s104, 1
      %p108 = scmp.eq.s32.totalorder %s33, 1
      %p109 = scmp.ne.s32.totalorder %s104, %s106
      %p110 = scmp.eq.s32.totalorder %s33, 0
      %p111 = por %p109, %p110
      %p112 = scmp.ne.s32.totalorder %s104, %s106
      %p113 = scmp.eq.s32.totalorder %s38, 1
      %p114 = por %p112, %p113
      %p115 = scmp.ne.s32.totalorder %s106, %s107
      %p116 = scmp.eq.s32.totalorder %s38, 0
      %p117 = por %p115, %p116
      %p118 = scmp.ne.s32.totalorder %s106, %s107
      %p119 = scmp.eq.s32.totalorder %s39, 1
      %p120 = por %p118, %p119
      %p122 = scmp.ne.s32.totalorder %s107, %s121
      %p123 = scmp.eq.s32.totalorder %s39, 0
      %p124 = por %p122, %p123
      %s125 = ssub.s32 %s33, %s40
      %p126 = scmp.eq.s32.totalorder %s125, 0
      %s128 = sadd.s32 %s127, 1
      %s129 = scalar_select %p126, %s127, %s128
      %p132 = pneg %p126
      %p133 = scmp.eq.s32.totalorder %s33, 1
      %p134 = por %p132, %p133
      %p135 = scmp.ne.s32.totalorder %s127, %s130
      %p136 = scmp.eq.s32.totalorder %s33, 0
      %p137 = por %p135, %p136
      %p138 = scmp.ne.s32.totalorder %s127, %s130
      %p139 = scmp.eq.s32.totalorder %s38, 1
      %p140 = por %p138, %p139
      %p141 = scmp.ne.s32.totalorder %s130, %s131
      %p142 = scmp.eq.s32.totalorder %s38, 0
      %p143 = por %p141, %p142
      %p144 = scmp.ne.s32.totalorder %s130, %s131
      %p145 = scmp.eq.s32.totalorder %s39, 1
      %p146 = por %p144, %p145
      %p148 = scmp.ne.s32.totalorder %s131, %s147
      %p149 = scmp.eq.s32.totalorder %s39, 0
      %p150 = por %p148, %p149
      %s151 = ssub.s32 %s33, %s40
      %p152 = scmp.eq.s32.totalorder %s151, 0
      %s154 = sadd.s32 %s153, 1
      %s155 = scalar_select %p152, %s153, %s154
      %p158 = pneg %p152
      %p159 = scmp.eq.s32.totalorder %s33, 1
      %p160 = por %p158, %p159
      %p161 = scmp.ne.s32.totalorder %s153, %s156
      %p162 = scmp.eq.s32.totalorder %s33, 0
      %p163 = por %p161, %p162
      %p164 = scmp.ne.s32.totalorder %s153, %s156
      %p165 = scmp.eq.s32.totalorder %s38, 1
      %p166 = por %p164, %p165
      %p167 = scmp.ne.s32.totalorder %s156, %s157
      %p168 = scmp.eq.s32.totalorder %s38, 0
      %p169 = por %p167, %p168
      %p170 = scmp.ne.s32.totalorder %s156, %s157
      %p171 = scmp.eq.s32.totalorder %s39, 1
      %p172 = por %p170, %p171
      %p174 = scmp.ne.s32.totalorder %s157, %s173
      %p175 = scmp.eq.s32.totalorder %s39, 0
      %p176 = por %p174, %p175
      %s177 = ssub.s32 %s33, %s40
      %p178 = scmp.eq.s32.totalorder %s177, 0
      %s180 = sadd.s32 %s179, 1
      %s181 = scalar_select %p178, %s179, %s180
      %p184 = pneg %p178
      %p185 = scmp.eq.s32.totalorder %s33, 1
      %p186 = por %p184, %p185
      %p187 = scmp.ne.s32.totalorder %s179, %s182
      %p188 = scmp.eq.s32.totalorder %s33, 0
      %p189 = por %p187, %p188
      %p190 = scmp.ne.s32.totalorder %s179, %s182
      %p191 = scmp.eq.s32.totalorder %s38, 1
      %p192 = por %p190, %p191
      %p193 = scmp.ne.s32.totalorder %s182, %s183
      %p194 = scmp.eq.s32.totalorder %s38, 0
      %p195 = por %p193, %p194
      %p196 = scmp.ne.s32.totalorder %s182, %s183
      %p197 = scmp.eq.s32.totalorder %s39, 1
      %p198 = por %p196, %p197
      %p200 = scmp.ne.s32.totalorder %s183, %s199
      %p201 = scmp.eq.s32.totalorder %s39, 0
      %p202 = por %p200, %p201
      %s203 = ssub.s32 %s33, %s40
      %p204 = scmp.eq.s32.totalorder %s203, 0
      %s206 = sadd.s32 %s205, 1
      %s207 = scalar_select %p204, %s205, %s206
      %p210 = pneg %p204
      %p211 = scmp.eq.s32.totalorder %s33, 1
      %p212 = por %p210, %p211
      %p213 = scmp.ne.s32.totalorder %s205, %s208
      %p214 = scmp.eq.s32.totalorder %s33, 0
      %p215 = por %p213, %p214
      %p216 = scmp.ne.s32.totalorder %s205, %s208
      %p217 = scmp.eq.s32.totalorder %s38, 1
      %p218 = por %p216, %p217
      %p219 = scmp.ne.s32.totalorder %s208, %s209
      %p220 = scmp.eq.s32.totalorder %s38, 0
      %p221 = por %p219, %p220
      %p222 = scmp.ne.s32.totalorder %s208, %s209
      %p223 = scmp.eq.s32.totalorder %s39, 1
      %p224 = por %p222, %p223
      %p226 = scmp.ne.s32.totalorder %s209, %s225
      %p227 = scmp.eq.s32.totalorder %s39, 0
      %p228 = por %p226, %p227
      %s229 = ssub.s32 %s33, %s40
      %p230 = scmp.eq.s32.totalorder %s229, 0
      %s232 = sadd.s32 %s231, 1
      %s233 = scalar_select %p230, %s231, %s232
      %p236 = pneg %p230
      %p237 = scmp.eq.s32.totalorder %s33, 1
      %p238 = por %p236, %p237
      %p239 = scmp.ne.s32.totalorder %s231, %s234
      %p240 = scmp.eq.s32.totalorder %s33, 0
      %p241 = por %p239, %p240
      %p242 = scmp.ne.s32.totalorder %s231, %s234
      %p243 = scmp.eq.s32.totalorder %s38, 1
      %p244 = por %p242, %p243
      %p245 = scmp.ne.s32.totalorder %s234, %s235
      %p246 = scmp.eq.s32.totalorder %s38, 0
      %p247 = por %p245, %p246
      %p248 = scmp.ne.s32.totalorder %s234, %s235
      %p249 = scmp.eq.s32.totalorder %s39, 1
      %p250 = por %p248, %p249
      %p252 = scmp.ne.s32.totalorder %s235, %s251
      %p253 = scmp.eq.s32.totalorder %s39, 0
      %p254 = por %p252, %p253
      %s255 = ssub.s32 %s33, %s40
      %p256 = scmp.eq.s32.totalorder %s255, 0
      %s258 = sadd.s32 %s257, 1
      %s259 = scalar_select %p256, %s257, %s258
      %p262 = pneg %p256
      %p263 = scmp.eq.s32.totalorder %s33, 1
      %p264 = por %p262, %p263
      %p265 = scmp.ne.s32.totalorder %s257, %s260
      %p266 = scmp.eq.s32.totalorder %s33, 0
      %p267 = por %p265, %p266
      %p268 = scmp.ne.s32.totalorder %s257, %s260
      %p269 = scmp.eq.s32.totalorder %s38, 1
      %p270 = por %p268, %p269
      %p271 = scmp.ne.s32.totalorder %s260, %s261
      %p272 = scmp.eq.s32.totalorder %s38, 0
      %p273 = por %p271, %p272
      %p274 = scmp.ne.s32.totalorder %s260, %s261
      %p275 = scmp.eq.s32.totalorder %s39, 1
      %p276 = por %p274, %p275
      %p278 = scmp.ne.s32.totalorder %s261, %s277
      %p279 = scmp.eq.s32.totalorder %s39, 0
      %p280 = por %p278, %p279
      %s281 = ssub.s32 %s33, %s40
      %p282 = scmp.eq.s32.totalorder %s281, 0
      %s284 = sadd.s32 %s283, 1
      %s285 = scalar_select %p282, %s283, %s284
      %p288 = pneg %p282
      %p289 = scmp.eq.s32.totalorder %s33, 1
      %p290 = por %p288, %p289
      %p291 = scmp.ne.s32.totalorder %s283, %s286
      %p292 = scmp.eq.s32.totalorder %s33, 0
      %p293 = por %p291, %p292
      %p294 = scmp.ne.s32.totalorder %s283, %s286
      %p295 = scmp.eq.s32.totalorder %s38, 1
      %p296 = por %p294, %p295
      %p297 = scmp.ne.s32.totalorder %s286, %s287
      %p298 = scmp.eq.s32.totalorder %s38, 0
      %p299 = por %p297, %p298
      %p300 = scmp.ne.s32.totalorder %s286, %s287
      %p301 = scmp.eq.s32.totalorder %s39, 1
      %p302 = por %p300, %p301
      %p304 = scmp.ne.s32.totalorder %s287, %s303
      %p305 = scmp.eq.s32.totalorder %s39, 0
      %p306 = por %p304, %p305
      %s307 = ssub.s32 %s33, %s40
      %p308 = scmp.eq.s32.totalorder %s307, 0
      %s310 = sadd.s32 %s309, 1
      %s311 = scalar_select %p308, %s309, %s310
      %p314 = pneg %p308
      %p315 = scmp.eq.s32.totalorder %s33, 1
      %p316 = por %p314, %p315
      %p317 = scmp.ne.s32.totalorder %s309, %s312
      %p318 = scmp.eq.s32.totalorder %s33, 0
      %p319 = por %p317, %p318
      %p320 = scmp.ne.s32.totalorder %s309, %s312
      %p321 = scmp.eq.s32.totalorder %s38, 1
      %p322 = por %p320, %p321
      %p323 = scmp.ne.s32.totalorder %s312, %s313
      %p324 = scmp.eq.s32.totalorder %s38, 0
      %p325 = por %p323, %p324
      %p326 = scmp.ne.s32.totalorder %s312, %s313
      %p327 = scmp.eq.s32.totalorder %s39, 1
      %p328 = por %p326, %p327
      %p330 = scmp.ne.s32.totalorder %s313, %s329
      %p331 = scmp.eq.s32.totalorder %s39, 0
      %p332 = por %p330, %p331
      %s333 = ssub.s32 %s33, %s40
      %p334 = scmp.eq.s32.totalorder %s333, 0
      %s336 = sadd.s32 %s335, 1
      %s337 = scalar_select %p334, %s335, %s336
      %p340 = pneg %p334
      %p341 = scmp.eq.s32.totalorder %s33, 1
      %p342 = por %p340, %p341
      %p343 = scmp.ne.s32.totalorder %s335, %s338
      %p344 = scmp.eq.s32.totalorder %s33, 0
      %p345 = por %p343, %p344
      %p346 = scmp.ne.s32.totalorder %s335, %s338
      %p347 = scmp.eq.s32.totalorder %s38, 1
      %p348 = por %p346, %p347
      %p349 = scmp.ne.s32.totalorder %s338, %s339
      %p350 = scmp.eq.s32.totalorder %s38, 0
      %p351 = por %p349, %p350
      %p352 = scmp.ne.s32.totalorder %s338, %s339
      %p353 = scmp.eq.s32.totalorder %s39, 1
      %p354 = por %p352, %p353
      %p356 = scmp.ne.s32.totalorder %s339, %s355
      %p357 = scmp.eq.s32.totalorder %s39, 0
      %p358 = por %p356, %p357
      %s359 = ssub.s32 %s33, %s40
      %p360 = scmp.eq.s32.totalorder %s359, 0
      %s362 = sadd.s32 %s361, 1
      %s363 = scalar_select %p360, %s361, %s362
      %p366 = pneg %p360
      %p367 = scmp.eq.s32.totalorder %s33, 1
      %p368 = por %p366, %p367
      %p369 = scmp.ne.s32.totalorder %s361, %s364
      %p370 = scmp.eq.s32.totalorder %s33, 0
      %p371 = por %p369, %p370
      %p372 = scmp.ne.s32.totalorder %s361, %s364
      %p373 = scmp.eq.s32.totalorder %s38, 1
      %p374 = por %p372, %p373
      %p375 = scmp.ne.s32.totalorder %s364, %s365
      %p376 = scmp.eq.s32.totalorder %s38, 0
      %p377 = por %p375, %p376
      %p378 = scmp.ne.s32.totalorder %s364, %s365
      %p379 = scmp.eq.s32.totalorder %s39, 1
      %p380 = por %p378, %p379
      %p382 = scmp.ne.s32.totalorder %s365, %s381
      %p383 = scmp.eq.s32.totalorder %s39, 0
      %p384 = por %p382, %p383
      %s385 = ssub.s32 %s33, %s40
      %p386 = scmp.eq.s32.totalorder %s385, 0
      %s388 = sadd.s32 %s387, 1
      %s389 = scalar_select %p386, %s387, %s388
      %p392 = pneg %p386
      %p393 = scmp.eq.s32.totalorder %s33, 1
      %p394 = por %p392, %p393
      %p395 = scmp.ne.s32.totalorder %s387, %s390
      %p396 = scmp.eq.s32.totalorder %s33, 0
      %p397 = por %p395, %p396
      %p398 = scmp.ne.s32.totalorder %s387, %s390
      %p399 = scmp.eq.s32.totalorder %s38, 1
      %p400 = por %p398, %p399
      %p401 = scmp.ne.s32.totalorder %s390, %s391
      %p402 = scmp.eq.s32.totalorder %s38, 0
      %p403 = por %p401, %p402
      %p404 = scmp.ne.s32.totalorder %s390, %s391
      %p405 = scmp.eq.s32.totalorder %s39, 1
      %p406 = por %p404, %p405
      %p408 = scmp.ne.s32.totalorder %s391, %s407
      %p409 = scmp.eq.s32.totalorder %s39, 0
      %p410 = por %p408, %p409
      %s411 = ssub.s32 %s33, %s40
      %p412 = scmp.eq.s32.totalorder %s411, 0
      %s414 = sadd.s32 %s413, 1
      %s415 = scalar_select %p412, %s413, %s414
      %p418 = pneg %p412
      %p419 = scmp.eq.s32.totalorder %s33, 1
      %p420 = por %p418, %p419
      %p421 = scmp.ne.s32.totalorder %s413, %s416
      %p422 = scmp.eq.s32.totalorder %s33, 0
      %p423 = por %p421, %p422
      %p424 = scmp.ne.s32.totalorder %s413, %s416
      %p425 = scmp.eq.s32.totalorder %s38, 1
      %p426 = por %p424, %p425
      %p427 = scmp.ne.s32.totalorder %s416, %s417
      %p428 = scmp.eq.s32.totalorder %s38, 0
      %p429 = por %p427, %p428
      %p430 = scmp.ne.s32.totalorder %s416, %s417
      %p431 = scmp.eq.s32.totalorder %s39, 1
      %p432 = por %p430, %p431
      %p434 = scmp.ne.s32.totalorder %s417, %s433
      %p435 = scmp.eq.s32.totalorder %s39, 0
      %p436 = por %p434, %p435
      %s438 = sadd.s32 %s437, 1
      %p441 = scmp.eq.s32.totalorder %s33, 1
      %p442 = scmp.ne.s32.totalorder %s437, %s439
      %p443 = scmp.eq.s32.totalorder %s33, 0
      %p444 = por %p442, %p443
      %p445 = scmp.ne.s32.totalorder %s437, %s439
      %p446 = scmp.eq.s32.totalorder %s38, 1
      %p447 = por %p445, %p446
      %p448 = scmp.ne.s32.totalorder %s439, %s440
      %p449 = scmp.eq.s32.totalorder %s38, 0
      %p450 = por %p448, %p449
      %p451 = scmp.ne.s32.totalorder %s439, %s440
      %p452 = scmp.eq.s32.totalorder %s39, 1
      %p453 = por %p451, %p452
      %p455 = scmp.ne.s32.totalorder %s440, %s454
      %p456 = scmp.eq.s32.totalorder %s39, 0
      %p457 = por %p455, %p456
      %s459 = sadd.s32 %s458, 1
      %p462 = scmp.eq.s32.totalorder %s33, 1
      %p463 = scmp.ne.s32.totalorder %s458, %s460
      %p464 = scmp.eq.s32.totalorder %s33, 0
      %p465 = por %p463, %p464
      %p466 = scmp.ne.s32.totalorder %s458, %s460
      %p467 = scmp.eq.s32.totalorder %s38, 1
      %p468 = por %p466, %p467
      %p469 = scmp.ne.s32.totalorder %s460, %s461
      %p470 = scmp.eq.s32.totalorder %s38, 0
      %p471 = por %p469, %p470
      %p472 = scmp.ne.s32.totalorder %s460, %s461
      %p473 = scmp.eq.s32.totalorder %s39, 1
      %p474 = por %p472, %p473
      %p476 = scmp.ne.s32.totalorder %s461, %s475
      %p477 = scmp.eq.s32.totalorder %s39, 0
      %p478 = por %p476, %p477
      %s480 = sadd.s32 %s479, 1
      %p483 = scmp.eq.s32.totalorder %s33, 1
      %p484 = scmp.ne.s32.totalorder %s479, %s481
      %p485 = scmp.eq.s32.totalorder %s33, 0
      %p486 = por %p484, %p485
      %p487 = scmp.ne.s32.totalorder %s479, %s481
      %p488 = scmp.eq.s32.totalorder %s38, 1
      %p489 = por %p487, %p488
      %p490 = scmp.ne.s32.totalorder %s481, %s482
      %p491 = scmp.eq.s32.totalorder %s38, 0
      %p492 = por %p490, %p491
      %p493 = scmp.ne.s32.totalorder %s481, %s482
      %p494 = scmp.eq.s32.totalorder %s39, 1
      %p495 = por %p493, %p494
      %p497 = scmp.ne.s32.totalorder %s482, %s496
      %p498 = scmp.eq.s32.totalorder %s39, 0
      %p499 = por %p497, %p498
      %s501 = sadd.s32 %s500, 1
      %p504 = scmp.eq.s32.totalorder %s33, 1
      %p505 = scmp.ne.s32.totalorder %s500, %s502
      %p506 = scmp.eq.s32.totalorder %s33, 0
      %p507 = por %p505, %p506
      %p508 = scmp.ne.s32.totalorder %s500, %s502
      %p509 = scmp.eq.s32.totalorder %s38, 1
      %p510 = por %p508, %p509
      %p511 = scmp.ne.s32.totalorder %s502, %s503
      %p512 = scmp.eq.s32.totalorder %s38, 0
      %p513 = por %p511, %p512
      %p514 = scmp.ne.s32.totalorder %s502, %s503
      %p515 = scmp.eq.s32.totalorder %s39, 1
      %p516 = por %p514, %p515
      %p518 = scmp.ne.s32.totalorder %s503, %s517
      %p519 = scmp.eq.s32.totalorder %s39, 0
      %p520 = por %p518, %p519
      %s522 = sadd.s32 %s521, 1
      %p525 = scmp.eq.s32.totalorder %s33, 1
      %p526 = scmp.ne.s32.totalorder %s521, %s523
      %p527 = scmp.eq.s32.totalorder %s33, 0
      %p528 = por %p526, %p527
      %p529 = scmp.ne.s32.totalorder %s521, %s523
      %p530 = scmp.eq.s32.totalorder %s38, 1
      %p531 = por %p529, %p530
      %p532 = scmp.ne.s32.totalorder %s523, %s524
      %p533 = scmp.eq.s32.totalorder %s38, 0
      %p534 = por %p532, %p533
      %p535 = scmp.ne.s32.totalorder %s523, %s524
      %p536 = scmp.eq.s32.totalorder %s39, 1
      %p537 = por %p535, %p536
      %p539 = scmp.ne.s32.totalorder %s524, %s538
      %p540 = scmp.eq.s32.totalorder %s39, 0
      %p541 = por %p539, %p540
      %p542 = scmp.le.s32.totalorder 1, %s33
      %p543 = scmp.lt.s32.totalorder %s33, 3
      %p544 = pnand %p542, %p543
      %p545 = pneg %p544
      // Predicated region
      $region9: #{text_model_forward.1} parent=5 // pred_check
        _
      $region10: #{text_model_forward.1} parent=5 // pred_check_branch
        %547 = sbr.rel (%p544) target = $region12
      $region11: #{text_model_forward.1} parent=5 // pred_region
        %s548 = ssub.s32 %s33, 1
        // Predicated region
        $region13: #{text_model_forward.1} parent=11 // pred_check
          %p549 = pneg %p54
        $region14: #{text_model_forward.1} parent=11 // pred_check_branch
          %551 = sbr.rel (%p549) target = $region16
        $region15: #{text_model_forward.1} parent=11 // pred_region
          _
        $region16: #{text_model_forward.1} parent=11 // pred_fallthru
          _
        // Predicated region
        $region17: #{text_model_forward.1} parent=11 // pred_check
          %p552 = pneg %p75
        $region18: #{text_model_forward.1} parent=11 // pred_check_branch
          %554 = sbr.rel (%p552) target = $region20
        $region19: #{text_model_forward.1} parent=11 // pred_region
          _
        $region20: #{text_model_forward.1} parent=11 // pred_fallthru
          _
        // Predicated region
        $region21: #{text_model_forward.1} parent=11 // pred_check
          %p555 = pneg %p96
        $region22: #{text_model_forward.1} parent=11 // pred_check_branch
          %557 = sbr.rel (%p555) target = $region24
        $region23: #{text_model_forward.1} parent=11 // pred_region
          _
        $region24: #{text_model_forward.1} parent=11 // pred_fallthru
          _
        // Predicated region
        $region25: #{text_model_forward.1} parent=11 // pred_check
          %p558 = pneg %p117
        $region26: #{text_model_forward.1} parent=11 // pred_check_branch
          %560 = sbr.rel (%p558) target = $region28
        $region27: #{text_model_forward.1} parent=11 // pred_region
          _
        $region28: #{text_model_forward.1} parent=11 // pred_fallthru
          _
        // Predicated region
        $region29: #{text_model_forward.1} parent=11 // pred_check
          %p561 = pneg %p450
        $region30: #{text_model_forward.1} parent=11 // pred_check_branch
          %563 = sbr.rel (%p561) target = $region32
        $region31: #{text_model_forward.1} parent=11 // pred_region
          _
        $region32: #{text_model_forward.1} parent=11 // pred_fallthru
          _
        // Predicated region
        $region33: #{text_model_forward.1} parent=11 // pred_check
          %p564 = pneg %p471
        $region34: #{text_model_forward.1} parent=11 // pred_check_branch
          %566 = sbr.rel (%p564) target = $region36
        $region35: #{text_model_forward.1} parent=11 // pred_region
          _
        $region36: #{text_model_forward.1} parent=11 // pred_fallthru
          _
        // Predicated region
        $region37: #{text_model_forward.1} parent=11 // pred_check
          %p567 = pneg %p492
        $region38: #{text_model_forward.1} parent=11 // pred_check_branch
          %569 = sbr.rel (%p567) target = $region40
        $region39: #{text_model_forward.1} parent=11 // pred_region
          _
        $region40: #{text_model_forward.1} parent=11 // pred_fallthru
          _
        // Predicated region
        $region41: #{text_model_forward.1} parent=11 // pred_check
          %p570 = pneg %p513
        $region42: #{text_model_forward.1} parent=11 // pred_check_branch
          %572 = sbr.rel (%p570) target = $region44
        $region43: #{text_model_forward.1} parent=11 // pred_region
          _
        $region44: #{text_model_forward.1} parent=11 // pred_fallthru
          _
      $region12: #{text_model_forward.1} parent=5 // pred_fallthru
        _
      %p573 = scmp.lt.s32.totalorder %s33, 2
      // Predicated region
      $region45: #{text_model_forward.1} parent=5 // pred_check
        %p574 = pneg %p573
      $region46: #{text_model_forward.1} parent=5 // pred_check_branch
        %576 = sbr.rel (%p574) target = $region48
      $region47: #{text_model_forward.1} parent=5 // pred_region
        // Predicated region
        $region49: #{text_model_forward.1} parent=47 // pred_check
          %p577 = pneg %p137
        $region50: #{text_model_forward.1} parent=47 // pred_check_branch
          %579 = sbr.rel (%p577) target = $region52
        $region51: #{text_model_forward.1} parent=47 // pred_region
          %s580 = sand.u32 %s127, 1
          %s581 = scalar_lea.sflag [#allocation4], %s580
          %s582 = sand.u32 %s127, 1
          %s583 = smul.addr %s582, 192
          %s584 = scalar_lea.vmem [#allocation3], %s583
          %586 = vsyncadd %s581, 0
          %s587 = smul.addr %s33, 48
          %s588 = smul.addr %s587, 4
          %s589 = scalar_lea.hbm %s4, %s588
          %s590 = sshll.u32 %s589, 4
          %s591 = int_to_ptr.hbm [resolvable:$true] %s590
          %s592 = sshll.u32 %s584, 4
          %s593 = int_to_ptr.vmem [resolvable:$true] %s592
          %598 = dma.hbm_to_vmem [thread:$0]  %s591, 3072, %s593, %s581, 192, 192, 12
        $region52: #{text_model_forward.1} parent=47 // pred_fallthru
          _
        // Predicated region
        $region53: #{text_model_forward.1} parent=47 // pred_check
          %p599 = pneg %p163
        $region54: #{text_model_forward.1} parent=47 // pred_check_branch
          %601 = sbr.rel (%p599) target = $region56
        $region55: #{text_model_forward.1} parent=47 // pred_region
          %p602 = scmp.lt.s32.totalorder %s33, 1
          %s603 = scalar_select %p602, %s33, 1
          %s604 = smul.addr %s603, 3
          %s605 = scalar_lea.vmem %s5, %s604
        $region56: #{text_model_forward.1} parent=47 // pred_fallthru
          _
        // Predicated region
        $region57: #{text_model_forward.1} parent=47 // pred_check
          %p606 = pneg %p189
        $region58: #{text_model_forward.1} parent=47 // pred_check_branch
          %608 = sbr.rel (%p606) target = $region60
        $region59: #{text_model_forward.1} parent=47 // pred_region
          %p609 = scmp.lt.s32.totalorder %s33, 1
          %s610 = scalar_select %p609, %s33, 1
          %s611 = smul.addr %s610, 16
          %s612 = smul.addr %s611, 4
          %s613 = scalar_lea.vmem %s6, %s612
        $region60: #{text_model_forward.1} parent=47 // pred_fallthru
          _
        // Predicated region
        $region61: #{text_model_forward.1} parent=47 // pred_check
          %p614 = pneg %p215
        $region62: #{text_model_forward.1} parent=47 // pred_check_branch
          %616 = sbr.rel (%p614) target = $region64
        $region63: #{text_model_forward.1} parent=47 // pred_region
          %p617 = scmp.lt.s32.totalorder %s33, 1
          %s618 = scalar_select %p617, %s33, 1
          %s619 = scalar_lea.vmem %s7, %s618
        $region64: #{text_model_forward.1} parent=47 // pred_fallthru
          _
        // Predicated region
        $region65: #{text_model_forward.1} parent=47 // pred_check
          %p620 = pneg %p241
        $region66: #{text_model_forward.1} parent=47 // pred_check_branch
          %622 = sbr.rel (%p620) target = $region68
        $region67: #{text_model_forward.1} parent=47 // pred_region
          %p623 = scmp.lt.s32.totalorder %s33, 1
          %s624 = scalar_select %p623, %s33, 1
          %s625 = scalar_lea.vmem %s8, %s624
        $region68: #{text_model_forward.1} parent=47 // pred_fallthru
          _
        // Predicated region
        $region69: #{text_model_forward.1} parent=47 // pred_check
          %p626 = pneg %p267
        $region70: #{text_model_forward.1} parent=47 // pred_check_branch
          %628 = sbr.rel (%p626) target = $region72
        $region71: #{text_model_forward.1} parent=47 // pred_region
          %p629 = scmp.lt.s32.totalorder %s33, 1
          %s630 = scalar_select %p629, %s33, 1
          %s631 = scalar_lea.vmem %s9, %s630
        $region72: #{text_model_forward.1} parent=47 // pred_fallthru
          _
        // Predicated region
        $region73: #{text_model_forward.1} parent=47 // pred_check
          %p632 = pneg %p293
        $region74: #{text_model_forward.1} parent=47 // pred_check_branch
          %634 = sbr.rel (%p632) target = $region76
        $region75: #{text_model_forward.1} parent=47 // pred_region
          %s635 = sand.u32 %s33, 1
          %s636 = scalar_lea.sflag [#allocation7], %s635
          %s637 = sand.u32 %s283, 1
          %s638 = smul.addr %s637, 256
          %s639 = scalar_lea.vmem [#allocation6], %s638
          %641 = vsyncadd %s636, 0
          %s642 = smul.addr %s33, 64
          %s643 = smul.addr %s642, 4
          %s644 = scalar_lea.hbm %s10, %s643
          %s645 = sshll.u32 %s644, 4
          %s646 = int_to_ptr.hbm [resolvable:$true] %s645
          %s647 = sshll.u32 %s639, 4
          %s648 = int_to_ptr.vmem [resolvable:$true] %s647
          %653 = dma.hbm_to_vmem [thread:$0]  %s646, 4096, %s648, %s636, 256, 256, 16
        $region76: #{text_model_forward.1} parent=47 // pred_fallthru
          _
        // Predicated region
        $region77: #{text_model_forward.1} parent=47 // pred_check
          %p654 = pneg %p319
        $region78: #{text_model_forward.1} parent=47 // pred_check_branch
          %656 = sbr.rel (%p654) target = $region80
        $region79: #{text_model_forward.1} parent=47 // pred_region
          %p657 = scmp.lt.s32.totalorder %s33, 1
          %s658 = scalar_select %p657, %s33, 1
          %s659 = smul.addr %s658, 4
          %s660 = scalar_lea.vmem %s11, %s659
        $region80: #{text_model_forward.1} parent=47 // pred_fallthru
          _
        // Predicated region
        $region81: #{text_model_forward.1} parent=47 // pred_check
          %p661 = pneg %p345
        $region82: #{text_model_forward.1} parent=47 // pred_check_branch
          %663 = sbr.rel (%p661) target = $region84
        $region83: #{text_model_forward.1} parent=47 // pred_region
          %s664 = sand.u32 %s33, 1
          %s665 = scalar_lea.sflag [#allocation7], %s664
          %s666 = sand.u32 %s335, 1
          %s667 = smul.addr %s666, 256
          %s668 = scalar_lea.vmem [#allocation8], %s667
          %670 = vsyncadd %s665, 0
          %s671 = smul.addr %s33, 64
          %s672 = smul.addr %s671, 4
          %s673 = scalar_lea.hbm %s12, %s672
          %s674 = sshll.u32 %s673, 4
          %s675 = int_to_ptr.hbm [resolvable:$true] %s674
          %s676 = sshll.u32 %s668, 4
          %s677 = int_to_ptr.vmem [resolvable:$true] %s676
          %682 = dma.hbm_to_vmem [thread:$0]  %s675, 4096, %s677, %s665, 64, 64, 4
        $region84: #{text_model_forward.1} parent=47 // pred_fallthru
          _
        // Predicated region
        $region85: #{text_model_forward.1} parent=47 // pred_check
          %p683 = pneg %p371
        $region86: #{text_model_forward.1} parent=47 // pred_check_branch
          %685 = sbr.rel (%p683) target = $region88
        $region87: #{text_model_forward.1} parent=47 // pred_region
          %p686 = scmp.lt.s32.totalorder %s33, 1
          %s687 = scalar_select %p686, %s33, 1
          %s688 = scalar_lea.vmem %s13, %s687
        $region88: #{text_model_forward.1} parent=47 // pred_fallthru
          _
        // Predicated region
        $region89: #{text_model_forward.1} parent=47 // pred_check
          %p689 = pneg %p397
        $region90: #{text_model_forward.1} parent=47 // pred_check_branch
          %691 = sbr.rel (%p689) target = $region92
        $region91: #{text_model_forward.1} parent=47 // pred_region
          %p692 = scmp.lt.s32.totalorder %s33, 1
          %s693 = scalar_select %p692, %s33, 1
          %s694 = scalar_lea.vmem %s14, %s693
        $region92: #{text_model_forward.1} parent=47 // pred_fallthru
          _
        // Predicated region
        $region93: #{text_model_forward.1} parent=47 // pred_check
          %p695 = pneg %p423
        $region94: #{text_model_forward.1} parent=47 // pred_check_branch
          %697 = sbr.rel (%p695) target = $region96
        $region95: #{text_model_forward.1} parent=47 // pred_region
          %p698 = scmp.lt.s32.totalorder %s33, 1
          %s699 = scalar_select %p698, %s33, 1
          %s700 = scalar_lea.vmem %s15, %s699
        $region96: #{text_model_forward.1} parent=47 // pred_fallthru
          _
      $region48: #{text_model_forward.1} parent=5 // pred_fallthru
        _
      %p701 = scmp.le.s32.totalorder 1, %s33
      %p702 = scmp.lt.s32.totalorder %s33, 3
      %p703 = pnand %p701, %p702
      %p704 = pneg %p703
      // Predicated region
      $region97: #{text_model_forward.1} parent=5 // pred_check
        _
      $region98: #{text_model_forward.1} parent=5 // pred_check_branch
        %706 = sbr.rel (%p703) target = $region100
      $region99: #{text_model_forward.1} parent=5 // pred_region
        %s707 = ssub.s32 %s33, 1
        %s708 = sand.u32 %s130, 1
        %s709 = scalar_lea.sflag [#allocation4], %s708
        %s710 = sand.u32 %s130, 1
        %s711 = smul.addr %s710, 192
        %s712 = scalar_lea.vmem [#allocation3], %s711
        // Predicated region
        $region101: #{text_model_forward.1} parent=99 // pred_check
          %p713 = pneg %p143
        $region102: #{text_model_forward.1} parent=99 // pred_check_branch
          %715 = sbr.rel (%p713) target = $region104
        $region103: #{text_model_forward.1} parent=99 // pred_region
          %717 = dma.done %s709, 3072
        $region104: #{text_model_forward.1} parent=99 // pred_fallthru
          _
        %s718 = sand.u32 %s38, 1
        %s719 = scalar_lea.sflag [#allocation7], %s718
        %s720 = sand.u32 %s286, 1
        %s721 = smul.addr %s720, 256
        %s722 = scalar_lea.vmem [#allocation6], %s721
        // Predicated region
        $region105: #{text_model_forward.1} parent=99 // pred_check
          %p723 = pneg %p299
        $region106: #{text_model_forward.1} parent=99 // pred_check_branch
          %725 = sbr.rel (%p723) target = $region108
        $region107: #{text_model_forward.1} parent=99 // pred_region
          %727 = dma.done %s719, 4096
        $region108: #{text_model_forward.1} parent=99 // pred_fallthru
          _
        %s728 = sand.u32 %s38, 1
        %s729 = scalar_lea.sflag [#allocation7], %s728
        %s730 = sand.u32 %s338, 1
        %s731 = smul.addr %s730, 256
        %s732 = scalar_lea.vmem [#allocation8], %s731
        // Predicated region
        $region109: #{text_model_forward.1} parent=99 // pred_check
          %p733 = pneg %p351
        $region110: #{text_model_forward.1} parent=99 // pred_check_branch
          %735 = sbr.rel (%p733) target = $region112
        $region111: #{text_model_forward.1} parent=99 // pred_region
          %737 = dma.done %s729, 4096
        $region112: #{text_model_forward.1} parent=99 // pred_fallthru
          _
        %p738 = pneg %p54
        %p739 = pneg %p51
        %p740 = pneg %p75
        %p741 = pneg %p72
        %p742 = pneg %p96
        %p743 = pneg %p93
        %p744 = pneg %p117
        %p745 = pneg %p114
        %s746 = sand.u32 %s130, 1
        %s747 = scalar_lea.sflag [#allocation4], %s746
        %s748 = sand.u32 %s130, 1
        %s749 = smul.addr %s748, 192
        %s750 = scalar_lea.vmem [#allocation3], %s749
        %p751 = pneg %p143
        %p752 = pneg %p140
        %p753 = scmp.lt.s32.totalorder %s38, 1
        %s754 = scalar_select %p753, %s38, 1
        %s755 = smul.addr %s754, 3
        %s756 = scalar_lea.vmem %s5, %s755
        %p757 = pneg %p169
        %p758 = pneg %p166
        %p759 = scmp.lt.s32.totalorder %s38, 1
        %s760 = scalar_select %p759, %s38, 1
        %s761 = smul.addr %s760, 16
        %s762 = smul.addr %s761, 4
        %s763 = scalar_lea.vmem %s6, %s762
        %p764 = pneg %p195
        %p765 = pneg %p192
        %p766 = scmp.lt.s32.totalorder %s38, 1
        %s767 = scalar_select %p766, %s38, 1
        %s768 = scalar_lea.vmem %s7, %s767
        %p769 = pneg %p221
        %p770 = pneg %p218
        %p771 = scmp.lt.s32.totalorder %s38, 1
        %s772 = scalar_select %p771, %s38, 1
        %s773 = scalar_lea.vmem %s8, %s772
        %p774 = pneg %p247
        %p775 = pneg %p244
        %p776 = scmp.lt.s32.totalorder %s38, 1
        %s777 = scalar_select %p776, %s38, 1
        %s778 = scalar_lea.vmem %s9, %s777
        %p779 = pneg %p273
        %p780 = pneg %p270
        %s781 = sand.u32 %s38, 1
        %s782 = scalar_lea.sflag [#allocation7], %s781
        %s783 = sand.u32 %s286, 1
        %s784 = smul.addr %s783, 256
        %s785 = scalar_lea.vmem [#allocation6], %s784
        %p786 = pneg %p299
        %p787 = pneg %p296
        %p788 = scmp.lt.s32.totalorder %s38, 1
        %s789 = scalar_select %p788, %s38, 1
        %s790 = smul.addr %s789, 4
        %s791 = scalar_lea.vmem %s11, %s790
        %p792 = pneg %p325
        %p793 = pneg %p322
        %s794 = sand.u32 %s38, 1
        %s795 = scalar_lea.sflag [#allocation7], %s794
        %s796 = sand.u32 %s338, 1
        %s797 = smul.addr %s796, 256
        %s798 = scalar_lea.vmem [#allocation8], %s797
        %p799 = pneg %p351
        %p800 = pneg %p348
        %p801 = scmp.lt.s32.totalorder %s38, 1
        %s802 = scalar_select %p801, %s38, 1
        %s803 = scalar_lea.vmem %s13, %s802
        %p804 = pneg %p377
        %p805 = pneg %p374
        %p806 = scmp.lt.s32.totalorder %s38, 1
        %s807 = scalar_select %p806, %s38, 1
        %s808 = scalar_lea.vmem %s14, %s807
        %p809 = pneg %p403
        %p810 = pneg %p400
        %p811 = scmp.lt.s32.totalorder %s38, 1
        %s812 = scalar_select %p811, %s38, 1
        %s813 = scalar_lea.vmem %s15, %s812
        %p814 = pneg %p429
        %p815 = pneg %p426
        %p816 = pneg %p450
        %p817 = pneg %p447
        %p818 = pneg %p471
        %p819 = pneg %p468
        %p820 = pneg %p492
        %p821 = pneg %p489
        %p822 = pneg %p513
        %p823 = pneg %p510
        %p824 = pneg %p534
        %p825 = pneg %p531
        %p826 = scmp.lt.s32.totalorder %s38, 1
        %s827 = scalar_select %p826, %s38, 1
        %s828 = smul.addr %s827, 3
        %s829 = scalar_lea.vmem %s5, %s828
        %p830 = scmp.lt.s32.totalorder %s38, 1
        %s831 = scalar_select %p830, %s38, 1
        %s832 = smul.addr %s831, 16
        %s833 = smul.addr %s832, 4
        %s834 = scalar_lea.vmem %s6, %s833
        %p835 = scmp.lt.s32.totalorder %s38, 1
        %s836 = scalar_select %p835, %s38, 1
        %s837 = scalar_lea.vmem %s7, %s836
        %p838 = scmp.lt.s32.totalorder %s38, 1
        %s839 = scalar_select %p838, %s38, 1
        %s840 = scalar_lea.vmem %s8, %s839
        %p841 = scmp.lt.s32.totalorder %s38, 1
        %s842 = scalar_select %p841, %s38, 1
        %s843 = scalar_lea.vmem %s9, %s842
        %p844 = scmp.lt.s32.totalorder %s38, 1
        %s845 = scalar_select %p844, %s38, 1
        %s846 = smul.addr %s845, 4
        %s847 = scalar_lea.vmem %s11, %s846
        %p848 = scmp.lt.s32.totalorder %s38, 1
        %s849 = scalar_select %p848, %s38, 1
        %s850 = scalar_lea.vmem %s13, %s849
        %p851 = scmp.lt.s32.totalorder %s38, 1
        %s852 = scalar_select %p851, %s38, 1
        %s853 = scalar_lea.vmem %s14, %s852
        %p854 = scmp.lt.s32.totalorder %s38, 1
        %s855 = scalar_select %p854, %s38, 1
        %s856 = scalar_lea.vmem %s15, %s855
        %p858 = scmp.eq.s32.totalorder %s38, 0
        // Predicated region
        $region113: #{text_model_forward.1} parent=99 // pred_check
          %p859 = pneg %p858
        $region114: #{text_model_forward.1} parent=99 // pred_check_branch
          %861 = sbr.rel (%p859) target = $region116
        $region115: #{text_model_forward.1} parent=99 // pred_region
          %v862 = vld [vmem:[%s0] sm:$0xff]
          %v863 = vld [vmem:[%s0 + $0x8] sm:$0xff]
          %v864 = vld [vmem:[%s2] sm:$0x1]
          %v865 = vld [vmem:[%s3] sm:$0x1]
          %866 = vadd.xlane.f32.xlu0 %v862
          %v867 = vpop.xlane.xlu0 %866
          %868 = vadd.xlane.f32.xlu0 %v863
          %v869 = vpop.xlane.xlu0 %868
          %v870 = vrcp.pop 128.0
          %v871 = vmul.f32 128.0, %v870
          %v872 = vsub.f32 1.0, %v871
          %v873 = vmul.f32 %v870, %v872
          %v874 = vadd.f32 %v870, %v873
          %vm875 = vweird.f32 %v870
          %v876 = vsel %vm875, %v870, %v874
          %v877 = vmul.f32 %v867, %v876
          %v878 = vmul.f32 %v869, %v876
          %v879 = vsub.f32 %v862, %v877
          %v880 = vsub.f32 %v863, %v878
          %v881 = vmul.f32 %v879, %v879
          %v882 = vmul.f32 %v880, %v880
          %883 = vadd.xlane.f32.xlu0 %v881
          %v884 = vpop.xlane.xlu0 %883
          %885 = vadd.xlane.f32.xlu0 %v882
          %v886 = vpop.xlane.xlu0 %885
          %v887 = vmul.f32 %v884, %v876
          %v888 = vmul.f32 %v886, %v876
          %v889 = vadd.f32 %v887, 1e-12
          %v890 = vadd.f32 %v888, 1e-12
          %v891 = vrsqrt.pop %v889
          %v892 = vmul.f32 %v891, %v889
          %v893 = vmul.f32 %v892, %v891
          %v894 = vmul.f32 0.5, %v893
          %v895 = vsub.f32 1.5, %v894
          %v896 = vmul.f32 %v891, %v895
          %vm897 = vweird.f32 %v889
          %vm898 = vweird.f32 %v891
          %vm899 = vmor %vm897, %vm898
          %v900 = vsel %vm899, %v891, %v896
          %v901 = vrsqrt.pop %v890
          %v902 = vmul.f32 %v901, %v890
          %v903 = vmul.f32 %v902, %v901
          %v904 = vmul.f32 0.5, %v903
          %v905 = vsub.f32 1.5, %v904
          %v906 = vmul.f32 %v901, %v905
          %vm907 = vweird.f32 %v890
          %vm908 = vweird.f32 %v901
          %vm909 = vmor %vm907, %vm908
          %v910 = vsel %vm909, %v901, %v906
          %v911 = vmul.f32 %v879, %v900
          %v912 = vmul.f32 %v880, %v910
          %v914 = vperm.slane %v864, 0
          %v916 = vmul.f32 %v911, %v914
          %v917 = vmul.f32 %v912, %v914
          %v919 = vperm.slane %v865, 0
          %v921 = vadd.f32 %v916, %v919
          %v922 = vadd.f32 %v917, %v919
          %923 = vst [vmem:[#allocation2] sm:$0xff] %v921
          %924 = vst [vmem:[#allocation2 + $0x8] sm:$0xff] %v922
        $region116: #{text_model_forward.1} parent=99 // pred_fallthru
          _
        %v925 = vld [vmem:[#allocation2] sm:$0xff]
        %v926 = vld [vmem:[#allocation2 + $0x8] sm:$0xff]
        %v927 = vpack.c.bf16 %v926, %v925
        %v928 = vld [vmem:[%s712] sm:$0xff]
        %v929 = vld [vmem:[%s712 + $0x8] sm:$0xf]
        %v930 = vld [vmem:[%s712 + $0xc] sm:$0xff]
        %v931 = vld [vmem:[%s712 + $0x14] sm:$0xf]
        %v932 = vld [vmem:[%s712 + $0x18] sm:$0xff]
        %v933 = vld [vmem:[%s712 + $0x20] sm:$0xf]
        %v934 = vld [vmem:[%s712 + $0x24] sm:$0xff]
        %v935 = vld [vmem:[%s712 + $0x2c] sm:$0xf]
        %v936 = vld [vmem:[%s712 + $0x30] sm:$0xff]
        %v937 = vld [vmem:[%s712 + $0x38] sm:$0xf]
        %v938 = vld [vmem:[%s712 + $0x3c] sm:$0xff]
        %v939 = vld [vmem:[%s712 + $0x44] sm:$0xf]
        %v940 = vld [vmem:[%s712 + $0x48] sm:$0xff]
        %v941 = vld [vmem:[%s712 + $0x50] sm:$0xf]
        %v942 = vld [vmem:[%s712 + $0x54] sm:$0xff]
        %v943 = vld [vmem:[%s712 + $0x5c] sm:$0xf]
        %v944 = vld [vmem:[%s712 + $0x60] sm:$0xff]
        %v945 = vld [vmem:[%s712 + $0x68] sm:$0xf]
        %v946 = vld [vmem:[%s712 + $0x6c] sm:$0xff]
        %v947 = vld [vmem:[%s712 + $0x74] sm:$0xf]
        %v948 = vld [vmem:[%s712 + $0x78] sm:$0xff]
        %v949 = vld [vmem:[%s712 + $0x80] sm:$0xf]
        %v950 = vld [vmem:[%s712 + $0x84] sm:$0xff]
        %v951 = vld [vmem:[%s712 + $0x8c] sm:$0xf]
        %v952 = vld [vmem:[%s712 + $0x90] sm:$0xff]
        %v953 = vld [vmem:[%s712 + $0x98] sm:$0xf]
        %v954 = vld [vmem:[%s712 + $0x9c] sm:$0xff]
        %v955 = vld [vmem:[%s712 + $0xa4] sm:$0xf]
        %v956 = vld [vmem:[%s712 + $0xa8] sm:$0xff]
        %v957 = vld [vmem:[%s712 + $0xb0] sm:$0xf]
        %v958 = vld [vmem:[%s712 + $0xb4] sm:$0xff]
        %v959 = vld [vmem:[%s712 + $0xbc] sm:$0xf]
        %v960 = vld [vmem:[%s829] sm:$0x7]
        %v962 = vperm.slane %v960, 0
        %v963 = vperm.slane %v960, 1
        %v964 = vperm.slane %v960, 2
        %v1000 = vunpack.c.l.b16 %v928
        %v1001 = vunpack.c.h.b16 %v928
        %v1002 = vunpack.c.l.b16 %v929
        %v1003 = vunpack.c.l.b16 %v930
        %v1004 = vunpack.c.h.b16 %v930
        %v1005 = vunpack.c.l.b16 %v931
        %v1006 = vunpack.c.l.b16 %v932
        %v1007 = vunpack.c.h.b16 %v932
        %v1008 = vunpack.c.l.b16 %v933
        %v1009 = vunpack.c.l.b16 %v934
        %v1010 = vunpack.c.h.b16 %v934
        %v1011 = vunpack.c.l.b16 %v935
        %v1012 = vunpack.c.l.b16 %v936
        %v1013 = vunpack.c.h.b16 %v936
        %v1014 = vunpack.c.l.b16 %v937
        %v1015 = vunpack.c.l.b16 %v938
        %v1016 = vunpack.c.h.b16 %v938
        %v1017 = vunpack.c.l.b16 %v939
        %v1018 = vunpack.c.l.b16 %v940
        %v1019 = vunpack.c.h.b16 %v940
        %v1020 = vunpack.c.l.b16 %v941
        %v1021 = vunpack.c.l.b16 %v942
        %v1022 = vunpack.c.h.b16 %v942
        %v1023 = vunpack.c.l.b16 %v943
        %v1024 = vunpack.c.l.b16 %v944
        %v1025 = vunpack.c.h.b16 %v944
        %v1026 = vunpack.c.l.b16 %v945
        %v1027 = vunpack.c.l.b16 %v946
        %v1028 = vunpack.c.h.b16 %v946
        %v1029 = vunpack.c.l.b16 %v947
        %v1030 = vunpack.c.l.b16 %v948
        %v1031 = vunpack.c.h.b16 %v948
        %v1032 = vunpack.c.l.b16 %v949
        %v1033 = vunpack.c.l.b16 %v950
        %v1034 = vunpack.c.h.b16 %v950
        %v1035 = vunpack.c.l.b16 %v951
        %v1036 = vunpack.c.l.b16 %v952
        %v1037 = vunpack.c.h.b16 %v952
        %v1038 = vunpack.c.l.b16 %v953
        %v1039 = vunpack.c.l.b16 %v954
        %v1040 = vunpack.c.h.b16 %v954
        %v1041 = vunpack.c.l.b16 %v955
        %v1042 = vunpack.c.l.b16 %v956
        %v1043 = vunpack.c.h.b16 %v956
        %v1044 = vunpack.c.l.b16 %v957
        %v1045 = vunpack.c.l.b16 %v958
        %v1046 = vunpack.c.h.b16 %v958
        %v1047 = vunpack.c.l.b16 %v959
        %v1048 = vpack.c.b16 %v1003, %v1000
        %v1049 = vpack.c.b16 %v1004, %v1001
        %v1050 = vpack.c.b16 %v1005, %v1002
        %v1051 = vpack.c.b16 %v1009, %v1006
        %v1052 = vpack.c.b16 %v1010, %v1007
        %v1053 = vpack.c.b16 %v1011, %v1008
        %v1054 = vpack.c.b16 %v1015, %v1012
        %v1055 = vpack.c.b16 %v1016, %v1013
        %v1056 = vpack.c.b16 %v1017, %v1014
        %v1057 = vpack.c.b16 %v1021, %v1018
        %v1058 = vpack.c.b16 %v1022, %v1019
        %v1059 = vpack.c.b16 %v1023, %v1020
        %v1060 = vpack.c.b16 %v1027, %v1024
        %v1061 = vpack.c.b16 %v1028, %v1025
        %v1062 = vpack.c.b16 %v1029, %v1026
        %v1063 = vpack.c.b16 %v1033, %v1030
        %v1064 = vpack.c.b16 %v1034, %v1031
        %v1065 = vpack.c.b16 %v1035, %v1032
        %v1066 = vpack.c.b16 %v1039, %v1036
        %v1067 = vpack.c.b16 %v1040, %v1037
        %v1068 = vpack.c.b16 %v1041, %v1038
        %v1069 = vpack.c.b16 %v1045, %v1042
        %v1070 = vpack.c.b16 %v1046, %v1043
        %v1071 = vpack.c.b16 %v1047, %v1044
        %1096 = vmatpush.bf16.msra.mxu0 %v1069
        %1097 = vmatpush.bf16.msra.mxu0 %v1066
        %1098 = vmatpush.bf16.msra.mxu0 %v1063
        %1099 = vmatpush.bf16.msra.mxu0 %v1060
        %1100 = vmatpush.bf16.msra.mxu0 %v1057
        %1101 = vmatpush.bf16.msra.mxu0 %v1054
        %1102 = vmatpush.bf16.msra.mxu0 %v1051
        %1103 = vmatpush.bf16.msra.mxu0 %v1048
        %1104 = vmatmul.bf16.gmra.mxu0 %v927
        %v1105 = vpop.f32.mrf.mxu0
        %v1106 = vadd.f32 %v962, %v1105
        %v1107 = vpop.f32.mrf.mxu0
        %v1108 = vadd.f32 %v962, %v1107
        %1109 = vdwg.mxu0
        %1110 = vmatpush.bf16.msra.mxu0 %v1070
        %1111 = vmatpush.bf16.msra.mxu0 %v1067
        %1112 = vmatpush.bf16.msra.mxu0 %v1064
        %1113 = vmatpush.bf16.msra.mxu0 %v1061
        %1114 = vmatpush.bf16.msra.mxu0 %v1058
        %1115 = vmatpush.bf16.msra.mxu0 %v1055
        %1116 = vmatpush.bf16.msra.mxu0 %v1052
        %1117 = vmatpush.bf16.msra.mxu0 %v1049
        %1118 = vmatmul.bf16.gmra.mxu0 %v927
        %v1119 = vpop.f32.mrf.mxu0
        %v1120 = vadd.f32 %v963, %v1119
        %v1121 = vpop.f32.mrf.mxu0
        %v1122 = vadd.f32 %v963, %v1121
        %1123 = vdwg.mxu0
        %1124 = vmatpush.bf16.msra.mxu0 %v1071
        %1125 = vmatpush.bf16.msra.mxu0 %v1068
        %1126 = vmatpush.bf16.msra.mxu0 %v1065
        %1127 = vmatpush.bf16.msra.mxu0 %v1062
        %1128 = vmatpush.bf16.msra.mxu0 %v1059
        %1129 = vmatpush.bf16.msra.mxu0 %v1056
        %1130 = vmatpush.bf16.msra.mxu0 %v1053
        %1131 = vmatpush.bf16.msra.mxu0 %v1050
        %1132 = vmatmul.bf16.gmra.mxu0 %v927
        %v1133 = vpop.f32.mrf.mxu0
        %v1134 = vadd.f32 %v964, %v1133
        %v1135 = vpop.f32.mrf.mxu0
        %v1136 = vadd.f32 %v964, %v1135
        %1137 = vdwg.mxu0
        %v1138 = vld [vmem:[%s1] sm:$0x1]
        %v1139 = vld [vmem:[%s1 + $0x1] sm:$0x1]
        %v1140 = vmul.f32 %v1106, 0.125
        %v1141 = vmul.f32 %v1108, 0.125
        %v1142 = vpack.c.bf16 %v1140, %v1140
        %v1143 = vpack.c.bf16 %v1141, %v1141
        %v1144 = vpack.c.bf16 %v1120, %v1120
        %v1145 = vpack.c.bf16 %v1122, %v1122
        %v1148 = vperm.slane %v1138, 0
        %v1149 = vperm.slane %v1139, 0
        %vm1152 = vcmask 523264
        %v1154 = vsel %vm1152, %v1142, 0
        %v1157 = vsel %vm1152, %v1144, 0
        %1159 = vmatpush.bf16.xpose.msra.mxu0 0
        %1160 = vmatpush.bf16.xpose.msra.mxu0 0
        %1161 = vmatpush.bf16.xpose.msra.mxu0 0
        %1162 = vmatpush.bf16.xpose.msra.mxu0 0
        %1163 = vmatpush.bf16.xpose.msra.mxu0 0
        %1164 = vmatpush.bf16.xpose.msra.mxu0 0
        %1165 = vmatpush.bf16.xpose.msra.mxu0 0
        %1166 = vmatpush.bf16.xpose.msra.mxu0 %v1157
        %1167 = vmatmul.bf16.gmra.mxu0 %v1154
        %v1168 = vpop.f32.mrf.mxu0
        %v1169 = vadd.f32 %v1148, %v1168
        %v1170 = vpop.f32.mrf.mxu0
        %1171 = vdwg.mxu0
        %v1173 = vsel %vm1152, %v1143, 0
        %v1176 = vsel %vm1152, %v1145, 0
        %1178 = vmatpush.bf16.xpose.msra.mxu0 0
        %1179 = vmatpush.bf16.xpose.msra.mxu0 0
        %1180 = vmatpush.bf16.xpose.msra.mxu0 0
        %1181 = vmatpush.bf16.xpose.msra.mxu0 0
        %1182 = vmatpush.bf16.xpose.msra.mxu0 0
        %1183 = vmatpush.bf16.xpose.msra.mxu0 0
        %1184 = vmatpush.bf16.xpose.msra.mxu0 0
        %1185 = vmatpush.bf16.xpose.msra.mxu0 %v1176
        %1186 = vmatmul.bf16.gmra.mxu0 %v1173
        %v1187 = vpop.f32.mrf.mxu0
        %v1188 = vadd.f32 %v1149, %v1187
        %v1189 = vpop.f32.mrf.mxu0
        %1190 = vdwg.mxu0
        %vm1191 = vcmask 64512
        %v1192 = vsel %vm1191, %v1169, -inf
        %1193 = vmax.xlane.f32.xlu0 %v1192
        %v1194 = vpop.xlane.xlu0 %1193
        %v1195 = vsel %vm1191, %v1188, -inf
        %1196 = vmax.xlane.f32.xlu0 %v1195
        %v1197 = vpop.xlane.xlu0 %1196
        %v1198 = vsub.f32 %v1169, %v1194
        %v1199 = vsub.f32 %v1188, %v1197
        %v1200 = vmul.f32 %v1198, 1.442695
        %v1201 = vpow.pop %v1200
        %v1202 = vmul.f32 %v1199, 1.442695
        %v1203 = vpow.pop %v1202
        %v1204 = vsel %vm1191, %v1201, 0.0
        %1205 = vadd.xlane.f32.xlu0 %v1204
        %v1206 = vpop.xlane.xlu0 %1205
        %v1207 = vsel %vm1191, %v1203, 0.0
        %1208 = vadd.xlane.f32.xlu0 %v1207
        %v1209 = vpop.xlane.xlu0 %1208
        %v1210 = vrcp.pop %v1206
        %v1211 = vmul.f32 %v1206, %v1210
        %v1212 = vsub.f32 1.0, %v1211
        %v1213 = vmul.f32 %v1210, %v1212
        %v1214 = vadd.f32 %v1210, %v1213
        %vm1215 = vweird.f32 %v1206
        %vm1216 = vweird.f32 %v1210
        %vm1217 = vmor %vm1215, %vm1216
        %v1218 = vsel %vm1217, %v1210, %v1214
        %v1219 = vand.u32 2147483647, %v1206
        %vm1220 = vcmp.eq.f32.partialorder %v1219, 8.507059e+37
        %v1221 = vand.u32 %v1206, 2147483648
        %v1222 = vor.u32 1.1754944e-38, %v1221
        %v1223 = vsel %vm1220, %v1222, %v1218
        %v1224 = vmul.f32 %v1201, %v1223
        %v1225 = vrcp.pop %v1209
        %v1226 = vmul.f32 %v1209, %v1225
        %v1227 = vsub.f32 1.0, %v1226
        %v1228 = vmul.f32 %v1225, %v1227
        %v1229 = vadd.f32 %v1225, %v1228
        %vm1230 = vweird.f32 %v1209
        %vm1231 = vweird.f32 %v1225
        %vm1232 = vmor %vm1230, %vm1231
        %v1233 = vsel %vm1232, %v1225, %v1229
        %v1234 = vand.u32 2147483647, %v1209
        %vm1235 = vcmp.eq.f32.partialorder %v1234, 8.507059e+37
        %v1236 = vand.u32 %v1209, 2147483648
        %v1237 = vor.u32 1.1754944e-38, %v1236
        %v1238 = vsel %vm1235, %v1237, %v1233
        %v1239 = vmul.f32 %v1203, %v1238
        %v1240 = vpack.c.bf16 %v1224, %v1224
        %v1241 = vpack.c.bf16 %v1239, %v1239
        %v1242 = vpack.c.bf16 %v1134, %v1134
        %v1243 = vpack.c.bf16 %v1136, %v1136
        %v1245 = vsel %vm1191, %v1240, 0
        %vm1247 = vcmask 1043456
        %v1249 = vsel %vm1247, %v1242, 0
        %1251 = vmatpush.bf16.msra.mxu0 0
        %1252 = vmatpush.bf16.msra.mxu0 0
        %1253 = vmatpush.bf16.msra.mxu0 0
        %1254 = vmatpush.bf16.msra.mxu0 0
        %1255 = vmatpush.bf16.msra.mxu0 0
        %1256 = vmatpush.bf16.msra.mxu0 0
        %1257 = vmatpush.bf16.msra.mxu0 0
        %1258 = vmatpush.bf16.msra.mxu0 %v1249
        %1259 = vmatmul.bf16.gmra.mxu0 %v1245
        %v1260 = vpop.f32.mrf.mxu0
        %v1261 = vadd.f32 0.0, %v1260
        %v1262 = vpop.f32.mrf.mxu0
        %1263 = vdwg.mxu0
        %v1265 = vsel %vm1191, %v1241, 0
        %v1268 = vsel %vm1247, %v1243, 0
        %1270 = vmatpush.bf16.msra.mxu0 0
        %1271 = vmatpush.bf16.msra.mxu0 0
        %1272 = vmatpush.bf16.msra.mxu0 0
        %1273 = vmatpush.bf16.msra.mxu0 0
        %1274 = vmatpush.bf16.msra.mxu0 0
        %1275 = vmatpush.bf16.msra.mxu0 0
        %1276 = vmatpush.bf16.msra.mxu0 0
        %1277 = vmatpush.bf16.msra.mxu0 %v1268
        %1278 = vmatmul.bf16.gmra.mxu0 %v1265
        %v1279 = vpop.f32.mrf.mxu0
        %v1280 = vadd.f32 0.0, %v1279
        %v1281 = vpop.f32.mrf.mxu0
        %1282 = vdwg.mxu0
        %v1284 = vunpack.c.l.b16 %v1142
        %v1285 = vpack.c.b16 %v1284, %v1284
        %1286 = vrot.lane.b32.xlu0 %v1285, 64
        %v1287 = vpop.permute.xlu0 %1286
        %v1289 = vunpack.c.l.b16 %v1144
        %v1290 = vpack.c.b16 %v1289, %v1289
        %1291 = vrot.lane.b32.xlu0 %v1290, 64
        %v1292 = vpop.permute.xlu0 %1291
        %v1294 = vsel %vm1152, %v1287, 0
        %v1297 = vsel %vm1152, %v1292, 0
        %1299 = vmatpush.bf16.xpose.msra.mxu0 0
        %1300 = vmatpush.bf16.xpose.msra.mxu0 0
        %1301 = vmatpush.bf16.xpose.msra.mxu0 0
        %1302 = vmatpush.bf16.xpose.msra.mxu0 0
        %1303 = vmatpush.bf16.xpose.msra.mxu0 0
        %1304 = vmatpush.bf16.xpose.msra.mxu0 0
        %1305 = vmatpush.bf16.xpose.msra.mxu0 0
        %1306 = vmatpush.bf16.xpose.msra.mxu0 %v1297
        %1307 = vmatmul.bf16.gmra.mxu0 %v1294
        %v1308 = vpop.f32.mrf.mxu0
        %v1309 = vadd.f32 %v1148, %v1308
        %v1310 = vpop.f32.mrf.mxu0
        %1311 = vdwg.mxu0
        %v1313 = vunpack.c.l.b16 %v1143
        %v1314 = vpack.c.b16 %v1313, %v1313
        %1315 = vrot.lane.b32.xlu0 %v1314, 64
        %v1316 = vpop.permute.xlu0 %1315
        %v1318 = vunpack.c.l.b16 %v1145
        %v1319 = vpack.c.b16 %v1318, %v1318
        %1320 = vrot.lane.b32.xlu0 %v1319, 64
        %v1321 = vpop.permute.xlu0 %1320
        %v1323 = vsel %vm1152, %v1316, 0
        %v1326 = vsel %vm1152, %v1321, 0
        %1328 = vmatpush.bf16.xpose.msra.mxu0 0
        %1329 = vmatpush.bf16.xpose.msra.mxu0 0
        %1330 = vmatpush.bf16.xpose.msra.mxu0 0
        %1331 = vmatpush.bf16.xpose.msra.mxu0 0
        %1332 = vmatpush.bf16.xpose.msra.mxu0 0
        %1333 = vmatpush.bf16.xpose.msra.mxu0 0
        %1334 = vmatpush.bf16.xpose.msra.mxu0 0
        %1335 = vmatpush.bf16.xpose.msra.mxu0 %v1326
        %1336 = vmatmul.bf16.gmra.mxu0 %v1323
        %v1337 = vpop.f32.mrf.mxu0
        %v1338 = vadd.f32 %v1149, %v1337
        %v1339 = vpop.f32.mrf.mxu0
        %1340 = vdwg.mxu0
        %v1341 = vsel %vm1191, %v1309, -inf
        %1342 = vmax.xlane.f32.xlu0 %v1341
        %v1343 = vpop.xlane.xlu0 %1342
        %v1344 = vsel %vm1191, %v1338, -inf
        %1345 = vmax.xlane.f32.xlu0 %v1344
        %v1346 = vpop.xlane.xlu0 %1345
        %v1347 = vsub.f32 %v1309, %v1343
        %v1348 = vsub.f32 %v1338, %v1346
        %v1349 = vmul.f32 %v1347, 1.442695
        %v1350 = vpow.pop %v1349
        %v1351 = vmul.f32 %v1348, 1.442695
        %v1352 = vpow.pop %v1351
        %v1353 = vsel %vm1191, %v1350, 0.0
        %1354 = vadd.xlane.f32.xlu0 %v1353
        %v1355 = vpop.xlane.xlu0 %1354
        %v1356 = vsel %vm1191, %v1352, 0.0
        %1357 = vadd.xlane.f32.xlu0 %v1356
        %v1358 = vpop.xlane.xlu0 %1357
        %v1359 = vrcp.pop %v1355
        %v1360 = vmul.f32 %v1355, %v1359
        %v1361 = vsub.f32 1.0, %v1360
        %v1362 = vmul.f32 %v1359, %v1361
        %v1363 = vadd.f32 %v1359, %v1362
        %vm1364 = vweird.f32 %v1355
        %vm1365 = vweird.f32 %v1359
        %vm1366 = vmor %vm1364, %vm1365
        %v1367 = vsel %vm1366, %v1359, %v1363
        %v1368 = vand.u32 2147483647, %v1355
        %vm1369 = vcmp.eq.f32.partialorder %v1368, 8.507059e+37
        %v1370 = vand.u32 %v1355, 2147483648
        %v1371 = vor.u32 1.1754944e-38, %v1370
        %v1372 = vsel %vm1369, %v1371, %v1367
        %v1373 = vmul.f32 %v1350, %v1372
        %v1374 = vrcp.pop %v1358
        %v1375 = vmul.f32 %v1358, %v1374
        %v1376 = vsub.f32 1.0, %v1375
        %v1377 = vmul.f32 %v1374, %v1376
        %v1378 = vadd.f32 %v1374, %v1377
        %vm1379 = vweird.f32 %v1358
        %vm1380 = vweird.f32 %v1374
        %vm1381 = vmor %vm1379, %vm1380
        %v1382 = vsel %vm1381, %v1374, %v1378
        %v1383 = vand.u32 2147483647, %v1358
        %vm1384 = vcmp.eq.f32.partialorder %v1383, 8.507059e+37
        %v1385 = vand.u32 %v1358, 2147483648
        %v1386 = vor.u32 1.1754944e-38, %v1385
        %v1387 = vsel %vm1384, %v1386, %v1382
        %v1388 = vmul.f32 %v1352, %v1387
        %v1389 = vpack.c.bf16 %v1373, %v1373
        %v1390 = vpack.c.bf16 %v1388, %v1388
        %v1392 = vunpack.c.l.b16 %v1242
        %v1393 = vpack.c.b16 %v1392, %v1392
        %1394 = vrot.lane.b32.xlu0 %v1393, 64
        %v1395 = vpop.permute.xlu0 %1394
        %v1397 = vsel %vm1191, %v1389, 0
        %v1400 = vsel %vm1247, %v1395, 0
        %1402 = vmatpush.bf16.msra.mxu0 0
        %1403 = vmatpush.bf16.msra.mxu0 0
        %1404 = vmatpush.bf16.msra.mxu0 0
        %1405 = vmatpush.bf16.msra.mxu0 0
        %1406 = vmatpush.bf16.msra.mxu0 0
        %1407 = vmatpush.bf16.msra.mxu0 0
        %1408 = vmatpush.bf16.msra.mxu0 0
        %1409 = vmatpush.bf16.msra.mxu0 %v1400
        %1410 = vmatmul.bf16.gmra.mxu0 %v1397
        %v1411 = vpop.f32.mrf.mxu0
        %v1412 = vadd.f32 0.0, %v1411
        %v1413 = vpop.f32.mrf.mxu0
        %1414 = vdwg.mxu0
        %v1416 = vunpack.c.l.b16 %v1243
        %v1417 = vpack.c.b16 %v1416, %v1416
        %1418 = vrot.lane.b32.xlu0 %v1417, 64
        %v1419 = vpop.permute.xlu0 %1418
        %v1421 = vsel %vm1191, %v1390, 0
        %v1424 = vsel %vm1247, %v1419, 0
        %1426 = vmatpush.bf16.msra.mxu0 0
        %1427 = vmatpush.bf16.msra.mxu0 0
        %1428 = vmatpush.bf16.msra.mxu0 0
        %1429 = vmatpush.bf16.msra.mxu0 0
        %1430 = vmatpush.bf16.msra.mxu0 0
        %1431 = vmatpush.bf16.msra.mxu0 0
        %1432 = vmatpush.bf16.msra.mxu0 0
        %1433 = vmatpush.bf16.msra.mxu0 %v1424
        %1434 = vmatmul.bf16.gmra.mxu0 %v1421
        %v1435 = vpop.f32.mrf.mxu0
        %v1436 = vadd.f32 0.0, %v1435
        %v1437 = vpop.f32.mrf.mxu0
        %1438 = vdwg.mxu0
        %1441 = vrot.lane.b32.xlu0 %v1412, 64
        %v1442 = vpop.permute.xlu0 %1441
        %1443 = vrot.lane.b32.xlu0 %v1436, 64
        %v1444 = vpop.permute.xlu0 %1443
        %v1447 = vsel %vm1152, %v1261, %v1442
        %v1448 = vsel %vm1152, %v1280, %v1444
        %v1449 = vpack.c.bf16 %v1448, %v1447
        %v1450 = vld [vmem:[%s834] sm:$0xf]
        %v1451 = vld [vmem:[%s834 + $0x4] sm:$0xf]
        %v1452 = vld [vmem:[%s834 + $0x8] sm:$0xf]
        %v1453 = vld [vmem:[%s834 + $0xc] sm:$0xf]
        %v1454 = vld [vmem:[%s834 + $0x10] sm:$0xf]
        %v1455 = vld [vmem:[%s834 + $0x14] sm:$0xf]
        %v1456 = vld [vmem:[%s834 + $0x18] sm:$0xf]
        %v1457 = vld [vmem:[%s834 + $0x1c] sm:$0xf]
        %v1458 = vld [vmem:[%s834 + $0x20] sm:$0xf]
        %v1459 = vld [vmem:[%s834 + $0x24] sm:$0xf]
        %v1460 = vld [vmem:[%s834 + $0x28] sm:$0xf]
        %v1461 = vld [vmem:[%s834 + $0x2c] sm:$0xf]
        %v1462 = vld [vmem:[%s834 + $0x30] sm:$0xf]
        %v1463 = vld [vmem:[%s834 + $0x34] sm:$0xf]
        %v1464 = vld [vmem:[%s834 + $0x38] sm:$0xf]
        %v1465 = vld [vmem:[%s834 + $0x3c] sm:$0xf]
        %v1466 = vld [vmem:[%s837] sm:$0x1]
        %v1468 = vperm.slane %v1466, 0
        %v1486 = vunpack.c.l.b16 %v1450
        %v1487 = vunpack.c.l.b16 %v1451
        %v1488 = vunpack.c.l.b16 %v1452
        %v1489 = vunpack.c.l.b16 %v1453
        %v1490 = vunpack.c.l.b16 %v1454
        %v1491 = vunpack.c.l.b16 %v1455
        %v1492 = vunpack.c.l.b16 %v1456
        %v1493 = vunpack.c.l.b16 %v1457
        %v1494 = vunpack.c.l.b16 %v1458
        %v1495 = vunpack.c.l.b16 %v1459
        %v1496 = vunpack.c.l.b16 %v1460
        %v1497 = vunpack.c.l.b16 %v1461
        %v1498 = vunpack.c.l.b16 %v1462
        %v1499 = vunpack.c.l.b16 %v1463
        %v1500 = vunpack.c.l.b16 %v1464
        %v1501 = vunpack.c.l.b16 %v1465
        %v1502 = vpack.c.b16 %v1487, %v1486
        %v1503 = vpack.c.b16 %v1489, %v1488
        %v1504 = vpack.c.b16 %v1491, %v1490
        %v1505 = vpack.c.b16 %v1493, %v1492
        %v1506 = vpack.c.b16 %v1495, %v1494
        %v1507 = vpack.c.b16 %v1497, %v1496
        %v1508 = vpack.c.b16 %v1499, %v1498
        %v1509 = vpack.c.b16 %v1501, %v1500
        %1518 = vmatpush.bf16.msra.mxu0 %v1509
        %1519 = vmatpush.bf16.msra.mxu0 %v1508
        %1520 = vmatpush.bf16.msra.mxu0 %v1507
        %1521 = vmatpush.bf16.msra.mxu0 %v1506
        %1522 = vmatpush.bf16.msra.mxu0 %v1505
        %1523 = vmatpush.bf16.msra.mxu0 %v1504
        %1524 = vmatpush.bf16.msra.mxu0 %v1503
        %1525 = vmatpush.bf16.msra.mxu0 %v1502
        %1526 = vmatmul.bf16.gmra.mxu0 %v1449
        %v1527 = vpop.f32.mrf.mxu0
        %v1528 = vadd.f32 %v1468, %v1527
        %v1529 = vpop.f32.mrf.mxu0
        %v1530 = vadd.f32 %v1468, %v1529
        %1531 = vdwg.mxu0
        %v1532 = vadd.f32 %v1528, %v925
        %v1533 = vadd.f32 %v1530, %v926
        %v1534 = vld [vmem:[%s840] sm:$0x1]
        %v1535 = vld [vmem:[%s843] sm:$0x1]
        %1536 = vadd.xlane.f32.xlu0 %v1532
        %v1537 = vpop.xlane.xlu0 %1536
        %1538 = vadd.xlane.f32.xlu0 %v1533
        %v1539 = vpop.xlane.xlu0 %1538
        %v1540 = vrcp.pop 128.0
        %v1541 = vmul.f32 128.0, %v1540
        %v1542 = vsub.f32 1.0, %v1541
        %v1543 = vmul.f32 %v1540, %v1542
        %v1544 = vadd.f32 %v1540, %v1543
        %vm1545 = vweird.f32 %v1540
        %v1546 = vsel %vm1545, %v1540, %v1544
        %v1547 = vmul.f32 %v1537, %v1546
        %v1548 = vmul.f32 %v1539, %v1546
        %v1549 = vsub.f32 %v1532, %v1547
        %v1550 = vsub.f32 %v1533, %v1548
        %v1551 = vmul.f32 %v1549, %v1549
        %v1552 = vmul.f32 %v1550, %v1550
        %1553 = vadd.xlane.f32.xlu0 %v1551
        %v1554 = vpop.xlane.xlu0 %1553
        %1555 = vadd.xlane.f32.xlu0 %v1552
        %v1556 = vpop.xlane.xlu0 %1555
        %v1557 = vmul.f32 %v1554, %v1546
        %v1558 = vmul.f32 %v1556, %v1546
        %v1559 = vadd.f32 %v1557, 1e-12
        %v1560 = vadd.f32 %v1558, 1e-12
        %v1561 = vrsqrt.pop %v1559
        %v1562 = vmul.f32 %v1561, %v1559
        %v1563 = vmul.f32 %v1562, %v1561
        %v1564 = vmul.f32 0.5, %v1563
        %v1565 = vsub.f32 1.5, %v1564
        %v1566 = vmul.f32 %v1561, %v1565
        %vm1567 = vweird.f32 %v1559
        %vm1568 = vweird.f32 %v1561
        %vm1569 = vmor %vm1567, %vm1568
        %v1570 = vsel %vm1569, %v1561, %v1566
        %v1571 = vrsqrt.pop %v1560
        %v1572 = vmul.f32 %v1571, %v1560
        %v1573 = vmul.f32 %v1572, %v1571
        %v1574 = vmul.f32 0.5, %v1573
        %v1575 = vsub.f32 1.5, %v1574
        %v1576 = vmul.f32 %v1571, %v1575
        %vm1577 = vweird.f32 %v1560
        %vm1578 = vweird.f32 %v1571
        %vm1579 = vmor %vm1577, %vm1578
        %v1580 = vsel %vm1579, %v1571, %v1576
        %v1581 = vmul.f32 %v1549, %v1570
        %v1582 = vmul.f32 %v1550, %v1580
        %v1584 = vperm.slane %v1534, 0
        %v1586 = vmul.f32 %v1581, %v1584
        %v1587 = vmul.f32 %v1582, %v1584
        %v1589 = vperm.slane %v1535, 0
        %v1591 = vadd.f32 %v1586, %v1589
        %v1592 = vadd.f32 %v1587, %v1589
        %v1593 = vpack.c.bf16 %v1592, %v1591
        %v1594 = vld [vmem:[%s722] sm:$0xff]
        %v1595 = vld [vmem:[%s722 + $0x8] sm:$0xff]
        %v1596 = vld [vmem:[%s722 + $0x10] sm:$0xff]
        %v1597 = vld [vmem:[%s722 + $0x18] sm:$0xff]
        %v1598 = vld [vmem:[%s722 + $0x20] sm:$0xff]
        %v1599 = vld [vmem:[%s722 + $0x28] sm:$0xff]
        %v1600 = vld [vmem:[%s722 + $0x30] sm:$0xff]
        %v1601 = vld [vmem:[%s722 + $0x38] sm:$0xff]
        %v1602 = vld [vmem:[%s722 + $0x40] sm:$0xff]
        %v1603 = vld [vmem:[%s722 + $0x48] sm:$0xff]
        %v1604 = vld [vmem:[%s722 + $0x50] sm:$0xff]
        %v1605 = vld [vmem:[%s722 + $0x58] sm:$0xff]
        %v1606 = vld [vmem:[%s722 + $0x60] sm:$0xff]
        %v1607 = vld [vmem:[%s722 + $0x68] sm:$0xff]
        %v1608 = vld [vmem:[%s722 + $0x70] sm:$0xff]
        %v1609 = vld [vmem:[%s722 + $0x78] sm:$0xff]
        %v1610 = vld [vmem:[%s722 + $0x80] sm:$0xff]
        %v1611 = vld [vmem:[%s722 + $0x88] sm:$0xff]
        %v1612 = vld [vmem:[%s722 + $0x90] sm:$0xff]
        %v1613 = vld [vmem:[%s722 + $0x98] sm:$0xff]
        %v1614 = vld [vmem:[%s722 + $0xa0] sm:$0xff]
        %v1615 = vld [vmem:[%s722 + $0xa8] sm:$0xff]
        %v1616 = vld [vmem:[%s722 + $0xb0] sm:$0xff]
        %v1617 = vld [vmem:[%s722 + $0xb8] sm:$0xff]
        %v1618 = vld [vmem:[%s722 + $0xc0] sm:$0xff]
        %v1619 = vld [vmem:[%s722 + $0xc8] sm:$0xff]
        %v1620 = vld [vmem:[%s722 + $0xd0] sm:$0xff]
        %v1621 = vld [vmem:[%s722 + $0xd8] sm:$0xff]
        %v1622 = vld [vmem:[%s722 + $0xe0] sm:$0xff]
        %v1623 = vld [vmem:[%s722 + $0xe8] sm:$0xff]
        %v1624 = vld [vmem:[%s722 + $0xf0] sm:$0xff]
        %v1625 = vld [vmem:[%s722 + $0xf8] sm:$0xff]
        %v1626 = vld [vmem:[%s847] sm:$0xf]
        %v1628 = vperm.slane %v1626, 0
        %v1629 = vperm.slane %v1626, 1
        %v1630 = vperm.slane %v1626, 2
        %v1631 = vperm.slane %v1626, 3
        %v1668 = vunpack.c.l.b16 %v1594
        %v1669 = vunpack.c.h.b16 %v1594
        %v1670 = vunpack.c.l.b16 %v1595
        %v1671 = vunpack.c.h.b16 %v1595
        %v1672 = vunpack.c.l.b16 %v1596
        %v1673 = vunpack.c.h.b16 %v1596
        %v1674 = vunpack.c.l.b16 %v1597
        %v1675 = vunpack.c.h.b16 %v1597
        %v1676 = vunpack.c.l.b16 %v1598
        %v1677 = vunpack.c.h.b16 %v1598
        %v1678 = vunpack.c.l.b16 %v1599
        %v1679 = vunpack.c.h.b16 %v1599
        %v1680 = vunpack.c.l.b16 %v1600
        %v1681 = vunpack.c.h.b16 %v1600
        %v1682 = vunpack.c.l.b16 %v1601
        %v1683 = vunpack.c.h.b16 %v1601
        %v1684 = vunpack.c.l.b16 %v1602
        %v1685 = vunpack.c.h.b16 %v1602
        %v1686 = vunpack.c.l.b16 %v1603
        %v1687 = vunpack.c.h.b16 %v1603
        %v1688 = vunpack.c.l.b16 %v1604
        %v1689 = vunpack.c.h.b16 %v1604
        %v1690 = vunpack.c.l.b16 %v1605
        %v1691 = vunpack.c.h.b16 %v1605
        %v1692 = vunpack.c.l.b16 %v1606
        %v1693 = vunpack.c.h.b16 %v1606
        %v1694 = vunpack.c.l.b16 %v1607
        %v1695 = vunpack.c.h.b16 %v1607
        %v1696 = vunpack.c.l.b16 %v1608
        %v1697 = vunpack.c.h.b16 %v1608
        %v1698 = vunpack.c.l.b16 %v1609
        %v1699 = vunpack.c.h.b16 %v1609
        %v1700 = vunpack.c.l.b16 %v1610
        %v1701 = vunpack.c.h.b16 %v1610
        %v1702 = vunpack.c.l.b16 %v1611
        %v1703 = vunpack.c.h.b16 %v1611
        %v1704 = vunpack.c.l.b16 %v1612
        %v1705 = vunpack.c.h.b16 %v1612
        %v1706 = vunpack.c.l.b16 %v1613
        %v1707 = vunpack.c.h.b16 %v1613
        %v1708 = vunpack.c.l.b16 %v1614
        %v1709 = vunpack.c.h.b16 %v1614
        %v1710 = vunpack.c.l.b16 %v1615
        %v1711 = vunpack.c.h.b16 %v1615
        %v1712 = vunpack.c.l.b16 %v1616
        %v1713 = vunpack.c.h.b16 %v1616
        %v1714 = vunpack.c.l.b16 %v1617
        %v1715 = vunpack.c.h.b16 %v1617
        %v1716 = vunpack.c.l.b16 %v1618
        %v1717 = vunpack.c.h.b16 %v1618
        %v1718 = vunpack.c.l.b16 %v1619
        %v1719 = vunpack.c.h.b16 %v1619
        %v1720 = vunpack.c.l.b16 %v1620
        %v1721 = vunpack.c.h.b16 %v1620
        %v1722 = vunpack.c.l.b16 %v1621
        %v1723 = vunpack.c.h.b16 %v1621
        %v1724 = vunpack.c.l.b16 %v1622
        %v1725 = vunpack.c.h.b16 %v1622
        %v1726 = vunpack.c.l.b16 %v1623
        %v1727 = vunpack.c.h.b16 %v1623
        %v1728 = vunpack.c.l.b16 %v1624
        %v1729 = vunpack.c.h.b16 %v1624
        %v1730 = vunpack.c.l.b16 %v1625
        %v1731 = vunpack.c.h.b16 %v1625
        %v1732 = vpack.c.b16 %v1672, %v1668
        %v1733 = vpack.c.b16 %v1673, %v1669
        %v1734 = vpack.c.b16 %v1674, %v1670
        %v1735 = vpack.c.b16 %v1675, %v1671
        %v1736 = vpack.c.b16 %v1680, %v1676
        %v1737 = vpack.c.b16 %v1681, %v1677
        %v1738 = vpack.c.b16 %v1682, %v1678
        %v1739 = vpack.c.b16 %v1683, %v1679
        %v1740 = vpack.c.b16 %v1688, %v1684
        %v1741 = vpack.c.b16 %v1689, %v1685
        %v1742 = vpack.c.b16 %v1690, %v1686
        %v1743 = vpack.c.b16 %v1691, %v1687
        %v1744 = vpack.c.b16 %v1696, %v1692
        %v1745 = vpack.c.b16 %v1697, %v1693
        %v1746 = vpack.c.b16 %v1698, %v1694
        %v1747 = vpack.c.b16 %v1699, %v1695
        %v1748 = vpack.c.b16 %v1704, %v1700
        %v1749 = vpack.c.b16 %v1705, %v1701
        %v1750 = vpack.c.b16 %v1706, %v1702
        %v1751 = vpack.c.b16 %v1707, %v1703
        %v1752 = vpack.c.b16 %v1712, %v1708
        %v1753 = vpack.c.b16 %v1713, %v1709
        %v1754 = vpack.c.b16 %v1714, %v1710
        %v1755 = vpack.c.b16 %v1715, %v1711
        %v1756 = vpack.c.b16 %v1720, %v1716
        %v1757 = vpack.c.b16 %v1721, %v1717
        %v1758 = vpack.c.b16 %v1722, %v1718
        %v1759 = vpack.c.b16 %v1723, %v1719
        %v1760 = vpack.c.b16 %v1728, %v1724
        %v1761 = vpack.c.b16 %v1729, %v1725
        %v1762 = vpack.c.b16 %v1730, %v1726
        %v1763 = vpack.c.b16 %v1731, %v1727
        %1796 = vmatpush.bf16.msra.mxu0 %v1760
        %1797 = vmatpush.bf16.msra.mxu0 %v1756
        %1798 = vmatpush.bf16.msra.mxu0 %v1752
        %1799 = vmatpush.bf16.msra.mxu0 %v1748
        %1800 = vmatpush.bf16.msra.mxu0 %v1744
        %1801 = vmatpush.bf16.msra.mxu0 %v1740
        %1802 = vmatpush.bf16.msra.mxu0 %v1736
        %1803 = vmatpush.bf16.msra.mxu0 %v1732
        %1804 = vmatmul.bf16.gmra.mxu0 %v1593
        %v1805 = vpop.f32.mrf.mxu0
        %v1806 = vadd.f32 %v1628, %v1805
        %v1807 = vpop.f32.mrf.mxu0
        %v1808 = vadd.f32 %v1628, %v1807
        %1809 = vdwg.mxu0
        %1810 = vmatpush.bf16.msra.mxu0 %v1761
        %1811 = vmatpush.bf16.msra.mxu0 %v1757
        %1812 = vmatpush.bf16.msra.mxu0 %v1753
        %1813 = vmatpush.bf16.msra.mxu0 %v1749
        %1814 = vmatpush.bf16.msra.mxu0 %v1745
        %1815 = vmatpush.bf16.msra.mxu0 %v1741
        %1816 = vmatpush.bf16.msra.mxu0 %v1737
        %1817 = vmatpush.bf16.msra.mxu0 %v1733
        %1818 = vmatmul.bf16.gmra.mxu0 %v1593
        %v1819 = vpop.f32.mrf.mxu0
        %v1820 = vadd.f32 %v1629, %v1819
        %v1821 = vpop.f32.mrf.mxu0
        %v1822 = vadd.f32 %v1629, %v1821
        %1823 = vdwg.mxu0
        %1824 = vmatpush.bf16.msra.mxu0 %v1762
        %1825 = vmatpush.bf16.msra.mxu0 %v1758
        %1826 = vmatpush.bf16.msra.mxu0 %v1754
        %1827 = vmatpush.bf16.msra.mxu0 %v1750
        %1828 = vmatpush.bf16.msra.mxu0 %v1746
        %1829 = vmatpush.bf16.msra.mxu0 %v1742
        %1830 = vmatpush.bf16.msra.mxu0 %v1738
        %1831 = vmatpush.bf16.msra.mxu0 %v1734
        %1832 = vmatmul.bf16.gmra.mxu0 %v1593
        %v1833 = vpop.f32.mrf.mxu0
        %v1834 = vadd.f32 %v1630, %v1833
        %v1835 = vpop.f32.mrf.mxu0
        %v1836 = vadd.f32 %v1630, %v1835
        %1837 = vdwg.mxu0
        %1838 = vmatpush.bf16.msra.mxu0 %v1763
        %1839 = vmatpush.bf16.msra.mxu0 %v1759
        %1840 = vmatpush.bf16.msra.mxu0 %v1755
        %1841 = vmatpush.bf16.msra.mxu0 %v1751
        %1842 = vmatpush.bf16.msra.mxu0 %v1747
        %1843 = vmatpush.bf16.msra.mxu0 %v1743
        %1844 = vmatpush.bf16.msra.mxu0 %v1739
        %1845 = vmatpush.bf16.msra.mxu0 %v1735
        %1846 = vmatmul.bf16.gmra.mxu0 %v1593
        %v1847 = vpop.f32.mrf.mxu0
        %v1848 = vadd.f32 %v1631, %v1847
        %v1849 = vpop.f32.mrf.mxu0
        %v1850 = vadd.f32 %v1631, %v1849
        %1851 = vdwg.mxu0
        %v1852 = vmul.f32 %v1806, 0.5
        %v1853 = vmul.f32 %v1820, 0.5
        %v1854 = vmul.f32 %v1834, 0.5
        %v1855 = vmul.f32 %v1848, 0.5
        %v1856 = vmul.f32 %v1808, 0.5
        %v1857 = vmul.f32 %v1822, 0.5
        %v1858 = vmul.f32 %v1836, 0.5
        %v1859 = vmul.f32 %v1850, 0.5
        %v1860 = vmul.f32 %v1806, 0.044715
        %v1861 = vmul.f32 %v1820, 0.044715
        %v1862 = vmul.f32 %v1834, 0.044715
        %v1863 = vmul.f32 %v1848, 0.044715
        %v1864 = vmul.f32 %v1808, 0.044715
        %v1865 = vmul.f32 %v1822, 0.044715
        %v1866 = vmul.f32 %v1836, 0.044715
        %v1867 = vmul.f32 %v1850, 0.044715
        %v1868 = vmul.f32 %v1860, %v1806
        %v1869 = vmul.f32 %v1861, %v1820
        %v1870 = vmul.f32 %v1862, %v1834
        %v1871 = vmul.f32 %v1863, %v1848
        %v1872 = vmul.f32 %v1864, %v1808
        %v1873 = vmul.f32 %v1865, %v1822
        %v1874 = vmul.f32 %v1866, %v1836
        %v1875 = vmul.f32 %v1867, %v1850
        %v1876 = vmul.f32 %v1868, %v1806
        %v1877 = vmul.f32 %v1869, %v1820
        %v1878 = vmul.f32 %v1870, %v1834
        %v1879 = vmul.f32 %v1871, %v1848
        %v1880 = vmul.f32 %v1872, %v1808
        %v1881 = vmul.f32 %v1873, %v1822
        %v1882 = vmul.f32 %v1874, %v1836
        %v1883 = vmul.f32 %v1875, %v1850
        %v1884 = vadd.f32 %v1806, %v1876
        %v1885 = vadd.f32 %v1820, %v1877
        %v1886 = vadd.f32 %v1834, %v1878
        %v1887 = vadd.f32 %v1848, %v1879
        %v1888 = vadd.f32 %v1808, %v1880
        %v1889 = vadd.f32 %v1822, %v1881
        %v1890 = vadd.f32 %v1836, %v1882
        %v1891 = vadd.f32 %v1850, %v1883
        %v1892 = vmul.f32 %v1884, 0.7978846
        %v1893 = vmul.f32 %v1885, 0.7978846
        %v1894 = vmul.f32 %v1886, 0.7978846
        %v1895 = vmul.f32 %v1887, 0.7978846
        %v1896 = vmul.f32 %v1888, 0.7978846
        %v1897 = vmul.f32 %v1889, 0.7978846
        %v1898 = vmul.f32 %v1890, 0.7978846
        %v1899 = vmul.f32 %v1891, 0.7978846
        %v1900 = vtanh.pop %v1892
        %v1901 = vtanh.pop %v1893
        %v1902 = vtanh.pop %v1894
        %v1903 = vtanh.pop %v1895
        %v1904 = vtanh.pop %v1896
        %v1905 = vtanh.pop %v1897
        %v1906 = vtanh.pop %v1898
        %v1907 = vtanh.pop %v1899
        %v1908 = vadd.f32 %v1900, 1.0
        %v1909 = vadd.f32 %v1901, 1.0
        %v1910 = vadd.f32 %v1902, 1.0
        %v1911 = vadd.f32 %v1903, 1.0
        %v1912 = vadd.f32 %v1904, 1.0
        %v1913 = vadd.f32 %v1905, 1.0
        %v1914 = vadd.f32 %v1906, 1.0
        %v1915 = vadd.f32 %v1907, 1.0
        %v1916 = vmul.f32 %v1852, %v1908
        %v1917 = vmul.f32 %v1853, %v1909
        %v1918 = vmul.f32 %v1854, %v1910
        %v1919 = vmul.f32 %v1855, %v1911
        %v1920 = vmul.f32 %v1856, %v1912
        %v1921 = vmul.f32 %v1857, %v1913
        %v1922 = vmul.f32 %v1858, %v1914
        %v1923 = vmul.f32 %v1859, %v1915
        %v1924 = vpack.c.bf16 %v1920, %v1916
        %v1925 = vpack.c.bf16 %v1921, %v1917
        %v1926 = vpack.c.bf16 %v1922, %v1918
        %v1927 = vpack.c.bf16 %v1923, %v1919
        %v1928 = vld [vmem:[%s732] sm:$0xf]
        %v1929 = vld [vmem:[%s732 + $0x4] sm:$0xf]
        %v1930 = vld [vmem:[%s732 + $0x8] sm:$0xf]
        %v1931 = vld [vmem:[%s732 + $0xc] sm:$0xf]
        %v1932 = vld [vmem:[%s732 + $0x10] sm:$0xf]
        %v1933 = vld [vmem:[%s732 + $0x14] sm:$0xf]
        %v1934 = vld [vmem:[%s732 + $0x18] sm:$0xf]
        %v1935 = vld [vmem:[%s732 + $0x1c] sm:$0xf]
        %v1936 = vld [vmem:[%s732 + $0x20] sm:$0xf]
        %v1937 = vld [vmem:[%s732 + $0x24] sm:$0xf]
        %v1938 = vld [vmem:[%s732 + $0x28] sm:$0xf]
        %v1939 = vld [vmem:[%s732 + $0x2c] sm:$0xf]
        %v1940 = vld [vmem:[%s732 + $0x30] sm:$0xf]
        %v1941 = vld [vmem:[%s732 + $0x34] sm:$0xf]
        %v1942 = vld [vmem:[%s732 + $0x38] sm:$0xf]
        %v1943 = vld [vmem:[%s732 + $0x3c] sm:$0xf]
        %v1944 = vld [vmem:[%s732 + $0x40] sm:$0xf]
        %v1945 = vld [vmem:[%s732 + $0x44] sm:$0xf]
        %v1946 = vld [vmem:[%s732 + $0x48] sm:$0xf]
        %v1947 = vld [vmem:[%s732 + $0x4c] sm:$0xf]
        %v1948 = vld [vmem:[%s732 + $0x50] sm:$0xf]
        %v1949 = vld [vmem:[%s732 + $0x54] sm:$0xf]
        %v1950 = vld [vmem:[%s732 + $0x58] sm:$0xf]
        %v1951 = vld [vmem:[%s732 + $0x5c] sm:$0xf]
        %v1952 = vld [vmem:[%s732 + $0x60] sm:$0xf]
        %v1953 = vld [vmem:[%s732 + $0x64] sm:$0xf]
        %v1954 = vld [vmem:[%s732 + $0x68] sm:$0xf]
        %v1955 = vld [vmem:[%s732 + $0x6c] sm:$0xf]
        %v1956 = vld [vmem:[%s732 + $0x70] sm:$0xf]
        %v1957 = vld [vmem:[%s732 + $0x74] sm:$0xf]
        %v1958 = vld [vmem:[%s732 + $0x78] sm:$0xf]
        %v1959 = vld [vmem:[%s732 + $0x7c] sm:$0xf]
        %v1960 = vld [vmem:[%s732 + $0x80] sm:$0xf]
        %v1961 = vld [vmem:[%s732 + $0x84] sm:$0xf]
        %v1962 = vld [vmem:[%s732 + $0x88] sm:$0xf]
        %v1963 = vld [vmem:[%s732 + $0x8c] sm:$0xf]
        %v1964 = vld [vmem:[%s732 + $0x90] sm:$0xf]
        %v1965 = vld [vmem:[%s732 + $0x94] sm:$0xf]
        %v1966 = vld [vmem:[%s732 + $0x98] sm:$0xf]
        %v1967 = vld [vmem:[%s732 + $0x9c] sm:$0xf]
        %v1968 = vld [vmem:[%s732 + $0xa0] sm:$0xf]
        %v1969 = vld [vmem:[%s732 + $0xa4] sm:$0xf]
        %v1970 = vld [vmem:[%s732 + $0xa8] sm:$0xf]
        %v1971 = vld [vmem:[%s732 + $0xac] sm:$0xf]
        %v1972 = vld [vmem:[%s732 + $0xb0] sm:$0xf]
        %v1973 = vld [vmem:[%s732 + $0xb4] sm:$0xf]
        %v1974 = vld [vmem:[%s732 + $0xb8] sm:$0xf]
        %v1975 = vld [vmem:[%s732 + $0xbc] sm:$0xf]
        %v1976 = vld [vmem:[%s732 + $0xc0] sm:$0xf]
        %v1977 = vld [vmem:[%s732 + $0xc4] sm:$0xf]
        %v1978 = vld [vmem:[%s732 + $0xc8] sm:$0xf]
        %v1979 = vld [vmem:[%s732 + $0xcc] sm:$0xf]
        %v1980 = vld [vmem:[%s732 + $0xd0] sm:$0xf]
        %v1981 = vld [vmem:[%s732 + $0xd4] sm:$0xf]
        %v1982 = vld [vmem:[%s732 + $0xd8] sm:$0xf]
        %v1983 = vld [vmem:[%s732 + $0xdc] sm:$0xf]
        %v1984 = vld [vmem:[%s732 + $0xe0] sm:$0xf]
        %v1985 = vld [vmem:[%s732 + $0xe4] sm:$0xf]
        %v1986 = vld [vmem:[%s732 + $0xe8] sm:$0xf]
        %v1987 = vld [vmem:[%s732 + $0xec] sm:$0xf]
        %v1988 = vld [vmem:[%s732 + $0xf0] sm:$0xf]
        %v1989 = vld [vmem:[%s732 + $0xf4] sm:$0xf]
        %v1990 = vld [vmem:[%s732 + $0xf8] sm:$0xf]
        %v1991 = vld [vmem:[%s732 + $0xfc] sm:$0xf]
        %v1992 = vld [vmem:[%s850] sm:$0x1]
        %v1994 = vperm.slane %v1992, 0
        %v2060 = vunpack.c.l.b16 %v1928
        %v2061 = vunpack.c.l.b16 %v1929
        %v2062 = vunpack.c.l.b16 %v1930
        %v2063 = vunpack.c.l.b16 %v1931
        %v2064 = vunpack.c.l.b16 %v1932
        %v2065 = vunpack.c.l.b16 %v1933
        %v2066 = vunpack.c.l.b16 %v1934
        %v2067 = vunpack.c.l.b16 %v1935
        %v2068 = vunpack.c.l.b16 %v1936
        %v2069 = vunpack.c.l.b16 %v1937
        %v2070 = vunpack.c.l.b16 %v1938
        %v2071 = vunpack.c.l.b16 %v1939
        %v2072 = vunpack.c.l.b16 %v1940
        %v2073 = vunpack.c.l.b16 %v1941
        %v2074 = vunpack.c.l.b16 %v1942
        %v2075 = vunpack.c.l.b16 %v1943
        %v2076 = vunpack.c.l.b16 %v1944
        %v2077 = vunpack.c.l.b16 %v1945
        %v2078 = vunpack.c.l.b16 %v1946
        %v2079 = vunpack.c.l.b16 %v1947
        %v2080 = vunpack.c.l.b16 %v1948
        %v2081 = vunpack.c.l.b16 %v1949
        %v2082 = vunpack.c.l.b16 %v1950
        %v2083 = vunpack.c.l.b16 %v1951
        %v2084 = vunpack.c.l.b16 %v1952
        %v2085 = vunpack.c.l.b16 %v1953
        %v2086 = vunpack.c.l.b16 %v1954
        %v2087 = vunpack.c.l.b16 %v1955
        %v2088 = vunpack.c.l.b16 %v1956
        %v2089 = vunpack.c.l.b16 %v1957
        %v2090 = vunpack.c.l.b16 %v1958
        %v2091 = vunpack.c.l.b16 %v1959
        %v2092 = vunpack.c.l.b16 %v1960
        %v2093 = vunpack.c.l.b16 %v1961
        %v2094 = vunpack.c.l.b16 %v1962
        %v2095 = vunpack.c.l.b16 %v1963
        %v2096 = vunpack.c.l.b16 %v1964
        %v2097 = vunpack.c.l.b16 %v1965
        %v2098 = vunpack.c.l.b16 %v1966
        %v2099 = vunpack.c.l.b16 %v1967
        %v2100 = vunpack.c.l.b16 %v1968
        %v2101 = vunpack.c.l.b16 %v1969
        %v2102 = vunpack.c.l.b16 %v1970
        %v2103 = vunpack.c.l.b16 %v1971
        %v2104 = vunpack.c.l.b16 %v1972
        %v2105 = vunpack.c.l.b16 %v1973
        %v2106 = vunpack.c.l.b16 %v1974
        %v2107 = vunpack.c.l.b16 %v1975
        %v2108 = vunpack.c.l.b16 %v1976
        %v2109 = vunpack.c.l.b16 %v1977
        %v2110 = vunpack.c.l.b16 %v1978
        %v2111 = vunpack.c.l.b16 %v1979
        %v2112 = vunpack.c.l.b16 %v1980
        %v2113 = vunpack.c.l.b16 %v1981
        %v2114 = vunpack.c.l.b16 %v1982
        %v2115 = vunpack.c.l.b16 %v1983
        %v2116 = vunpack.c.l.b16 %v1984
        %v2117 = vunpack.c.l.b16 %v1985
        %v2118 = vunpack.c.l.b16 %v1986
        %v2119 = vunpack.c.l.b16 %v1987
        %v2120 = vunpack.c.l.b16 %v1988
        %v2121 = vunpack.c.l.b16 %v1989
        %v2122 = vunpack.c.l.b16 %v1990
        %v2123 = vunpack.c.l.b16 %v1991
        %v2124 = vpack.c.b16 %v2061, %v2060
        %v2125 = vpack.c.b16 %v2063, %v2062
        %v2126 = vpack.c.b16 %v2065, %v2064
        %v2127 = vpack.c.b16 %v2067, %v2066
        %v2128 = vpack.c.b16 %v2069, %v2068
        %v2129 = vpack.c.b16 %v2071, %v2070
        %v2130 = vpack.c.b16 %v2073, %v2072
        %v2131 = vpack.c.b16 %v2075, %v2074
        %v2132 = vpack.c.b16 %v2077, %v2076
        %v2133 = vpack.c.b16 %v2079, %v2078
        %v2134 = vpack.c.b16 %v2081, %v2080
        %v2135 = vpack.c.b16 %v2083, %v2082
        %v2136 = vpack.c.b16 %v2085, %v2084
        %v2137 = vpack.c.b16 %v2087, %v2086
        %v2138 = vpack.c.b16 %v2089, %v2088
        %v2139 = vpack.c.b16 %v2091, %v2090
        %v2140 = vpack.c.b16 %v2093, %v2092
        %v2141 = vpack.c.b16 %v2095, %v2094
        %v2142 = vpack.c.b16 %v2097, %v2096
        %v2143 = vpack.c.b16 %v2099, %v2098
        %v2144 = vpack.c.b16 %v2101, %v2100
        %v2145 = vpack.c.b16 %v2103, %v2102
        %v2146 = vpack.c.b16 %v2105, %v2104
        %v2147 = vpack.c.b16 %v2107, %v2106
        %v2148 = vpack.c.b16 %v2109, %v2108
        %v2149 = vpack.c.b16 %v2111, %v2110
        %v2150 = vpack.c.b16 %v2113, %v2112
        %v2151 = vpack.c.b16 %v2115, %v2114
        %v2152 = vpack.c.b16 %v2117, %v2116
        %v2153 = vpack.c.b16 %v2119, %v2118
        %v2154 = vpack.c.b16 %v2121, %v2120
        %v2155 = vpack.c.b16 %v2123, %v2122
        %2188 = vmatpush.bf16.msra.mxu0 %v2131
        %2189 = vmatpush.bf16.msra.mxu0 %v2130
        %2190 = vmatpush.bf16.msra.mxu0 %v2129
        %2191 = vmatpush.bf16.msra.mxu0 %v2128
        %2192 = vmatpush.bf16.msra.mxu0 %v2127
        %2193 = vmatpush.bf16.msra.mxu0 %v2126
        %2194 = vmatpush.bf16.msra.mxu0 %v2125
        %2195 = vmatpush.bf16.msra.mxu0 %v2124
        %2196 = vmatmul.bf16.gmra.mxu0 %v1924
        %v2197 = vpop.f32.mrf.mxu0
        %v2198 = vadd.f32 %v1994, %v2197
        %v2199 = vpop.f32.mrf.mxu0
        %v2200 = vadd.f32 %v1994, %v2199
        %2201 = vdwg.mxu0
        %2202 = vmatpush.bf16.msra.mxu0 %v2139
        %2203 = vmatpush.bf16.msra.mxu0 %v2138
        %2204 = vmatpush.bf16.msra.mxu0 %v2137
        %2205 = vmatpush.bf16.msra.mxu0 %v2136
        %2206 = vmatpush.bf16.msra.mxu0 %v2135
        %2207 = vmatpush.bf16.msra.mxu0 %v2134
        %2208 = vmatpush.bf16.msra.mxu0 %v2133
        %2209 = vmatpush.bf16.msra.mxu0 %v2132
        %2210 = vmatmul.bf16.gmra.mxu0 %v1925
        %v2211 = vpop.f32.mrf.mxu0
        %v2212 = vadd.f32 %v2198, %v2211
        %v2213 = vpop.f32.mrf.mxu0
        %v2214 = vadd.f32 %v2200, %v2213
        %2215 = vdwg.mxu0
        %2216 = vmatpush.bf16.msra.mxu0 %v2147
        %2217 = vmatpush.bf16.msra.mxu0 %v2146
        %2218 = vmatpush.bf16.msra.mxu0 %v2145
        %2219 = vmatpush.bf16.msra.mxu0 %v2144
        %2220 = vmatpush.bf16.msra.mxu0 %v2143
        %2221 = vmatpush.bf16.msra.mxu0 %v2142
        %2222 = vmatpush.bf16.msra.mxu0 %v2141
        %2223 = vmatpush.bf16.msra.mxu0 %v2140
        %2224 = vmatmul.bf16.gmra.mxu0 %v1926
        %v2225 = vpop.f32.mrf.mxu0
        %v2226 = vadd.f32 %v2212, %v2225
        %v2227 = vpop.f32.mrf.mxu0
        %v2228 = vadd.f32 %v2214, %v2227
        %2229 = vdwg.mxu0
        %2230 = vmatpush.bf16.msra.mxu0 %v2155
        %2231 = vmatpush.bf16.msra.mxu0 %v2154
        %2232 = vmatpush.bf16.msra.mxu0 %v2153
        %2233 = vmatpush.bf16.msra.mxu0 %v2152
        %2234 = vmatpush.bf16.msra.mxu0 %v2151
        %2235 = vmatpush.bf16.msra.mxu0 %v2150
        %2236 = vmatpush.bf16.msra.mxu0 %v2149
        %2237 = vmatpush.bf16.msra.mxu0 %v2148
        %2238 = vmatmul.bf16.gmra.mxu0 %v1927
        %v2239 = vpop.f32.mrf.mxu0
        %v2240 = vadd.f32 %v2226, %v2239
        %v2241 = vpop.f32.mrf.mxu0
        %v2242 = vadd.f32 %v2228, %v2241
        %2243 = vdwg.mxu0
        %v2244 = vadd.f32 %v2240, %v1591
        %v2245 = vadd.f32 %v2242, %v1592
        %v2246 = vld [vmem:[%s853] sm:$0x1]
        %v2247 = vld [vmem:[%s856] sm:$0x1]
        %2248 = vadd.xlane.f32.xlu0 %v2244
        %v2249 = vpop.xlane.xlu0 %2248
        %2250 = vadd.xlane.f32.xlu0 %v2245
        %v2251 = vpop.xlane.xlu0 %2250
        %v2252 = vmul.f32 %v2249, %v1546
        %v2253 = vmul.f32 %v2251, %v1546
        %v2254 = vsub.f32 %v2244, %v2252
        %v2255 = vsub.f32 %v2245, %v2253
        %v2256 = vmul.f32 %v2254, %v2254
        %v2257 = vmul.f32 %v2255, %v2255
        %2258 = vadd.xlane.f32.xlu0 %v2256
        %v2259 = vpop.xlane.xlu0 %2258
        %2260 = vadd.xlane.f32.xlu0 %v2257
        %v2261 = vpop.xlane.xlu0 %2260
        %v2262 = vmul.f32 %v2259, %v1546
        %v2263 = vmul.f32 %v2261, %v1546
        %v2264 = vadd.f32 %v2262, 1e-12
        %v2265 = vadd.f32 %v2263, 1e-12
        %v2266 = vrsqrt.pop %v2264
        %v2267 = vmul.f32 %v2266, %v2264
        %v2268 = vmul.f32 %v2267, %v2266
        %v2269 = vmul.f32 0.5, %v2268
        %v2270 = vsub.f32 1.5, %v2269
        %v2271 = vmul.f32 %v2266, %v2270
        %vm2272 = vweird.f32 %v2264
        %vm2273 = vweird.f32 %v2266
        %vm2274 = vmor %vm2272, %vm2273
        %v2275 = vsel %vm2274, %v2266, %v2271
        %v2276 = vrsqrt.pop %v2265
        %v2277 = vmul.f32 %v2276, %v2265
        %v2278 = vmul.f32 %v2277, %v2276
        %v2279 = vmul.f32 0.5, %v2278
        %v2280 = vsub.f32 1.5, %v2279
        %v2281 = vmul.f32 %v2276, %v2280
        %vm2282 = vweird.f32 %v2265
        %vm2283 = vweird.f32 %v2276
        %vm2284 = vmor %vm2282, %vm2283
        %v2285 = vsel %vm2284, %v2276, %v2281
        %v2286 = vmul.f32 %v2254, %v2275
        %v2287 = vmul.f32 %v2255, %v2285
        %v2289 = vperm.slane %v2246, 0
        %v2291 = vmul.f32 %v2286, %v2289
        %v2292 = vmul.f32 %v2287, %v2289
        %v2294 = vperm.slane %v2247, 0
        %v2296 = vadd.f32 %v2291, %v2294
        %v2297 = vadd.f32 %v2292, %v2294
        %2298 = vst [vmem:[#allocation2] sm:$0xff] %v2296
        %2299 = vst [vmem:[#allocation2 + $0x8] sm:$0xff] %v2297
        %p2300 = scmp.eq.s32.totalorder %s38, 1
        // Predicated region
        $region117: #{text_model_forward.1} parent=99 // pred_check
          %p2301 = pneg %p2300
        $region118: #{text_model_forward.1} parent=99 // pred_check_branch
          %2303 = sbr.rel (%p2301) target = $region120
        $region119: #{text_model_forward.1} parent=99 // pred_region
          %v2305 = vrot.slane %v2297, 7
          %vm2307 = vcmask 1040384
          %v2308 = vsel %vm2307, %v2296, %v2305
          %v2309 = vpack.c.bf16 %v2308, %v2308
          %v2310 = vld [vmem:[%s16] sm:$0xf]
          %v2311 = vld [vmem:[%s16 + $0x4] sm:$0xf]
          %v2312 = vld [vmem:[%s16 + $0x8] sm:$0xf]
          %v2313 = vld [vmem:[%s16 + $0xc] sm:$0xf]
          %v2314 = vld [vmem:[%s16 + $0x10] sm:$0xf]
          %v2315 = vld [vmem:[%s16 + $0x14] sm:$0xf]
          %v2316 = vld [vmem:[%s16 + $0x18] sm:$0xf]
          %v2317 = vld [vmem:[%s16 + $0x1c] sm:$0xf]
          %v2318 = vld [vmem:[%s16 + $0x20] sm:$0xf]
          %v2319 = vld [vmem:[%s16 + $0x24] sm:$0xf]
          %v2320 = vld [vmem:[%s16 + $0x28] sm:$0xf]
          %v2321 = vld [vmem:[%s16 + $0x2c] sm:$0xf]
          %v2322 = vld [vmem:[%s16 + $0x30] sm:$0xf]
          %v2323 = vld [vmem:[%s16 + $0x34] sm:$0xf]
          %v2324 = vld [vmem:[%s16 + $0x38] sm:$0xf]
          %v2325 = vld [vmem:[%s16 + $0x3c] sm:$0xf]
          %v2326 = vld [vmem:[%s17] sm:$0x1]
          %v2328 = vperm.slane %v2326, 0
          %v2346 = vunpack.c.l.b16 %v2310
          %v2347 = vunpack.c.l.b16 %v2311
          %v2348 = vunpack.c.l.b16 %v2312
          %v2349 = vunpack.c.l.b16 %v2313
          %v2350 = vunpack.c.l.b16 %v2314
          %v2351 = vunpack.c.l.b16 %v2315
          %v2352 = vunpack.c.l.b16 %v2316
          %v2353 = vunpack.c.l.b16 %v2317
          %v2354 = vunpack.c.l.b16 %v2318
          %v2355 = vunpack.c.l.b16 %v2319
          %v2356 = vunpack.c.l.b16 %v2320
          %v2357 = vunpack.c.l.b16 %v2321
          %v2358 = vunpack.c.l.b16 %v2322
          %v2359 = vunpack.c.l.b16 %v2323
          %v2360 = vunpack.c.l.b16 %v2324
          %v2361 = vunpack.c.l.b16 %v2325
          %v2362 = vpack.c.b16 %v2347, %v2346
          %v2363 = vpack.c.b16 %v2349, %v2348
          %v2364 = vpack.c.b16 %v2351, %v2350
          %v2365 = vpack.c.b16 %v2353, %v2352
          %v2366 = vpack.c.b16 %v2355, %v2354
          %v2367 = vpack.c.b16 %v2357, %v2356
          %v2368 = vpack.c.b16 %v2359, %v2358
          %v2369 = vpack.c.b16 %v2361, %v2360
          %2378 = vmatpush.bf16.msra.mxu0 %v2369
          %2379 = vmatpush.bf16.msra.mxu0 %v2368
          %2380 = vmatpush.bf16.msra.mxu0 %v2367
          %2381 = vmatpush.bf16.msra.mxu0 %v2366
          %2382 = vmatpush.bf16.msra.mxu0 %v2365
          %2383 = vmatpush.bf16.msra.mxu0 %v2364
          %2384 = vmatpush.bf16.msra.mxu0 %v2363
          %2385 = vmatpush.bf16.msra.mxu0 %v2362
          %2386 = vmatmul.bf16.gmra.mxu0 %v2309
          %v2387 = vpop.f32.mrf.mxu0
          %v2388 = vadd.f32 %v2328, %v2387
          %v2389 = vpop.f32.mrf.mxu0
          %2390 = vdwg.mxu0
          %v2391 = vtanh.pop %v2388
          %v2392 = vpack.c.bf16 %v2391, %v2391
          %v2393 = vld [vmem:[%s18] sm:$0xff]
          %v2394 = vld [vmem:[%s18 + $0x8] sm:$0xff]
          %v2395 = vld [vmem:[%s18 + $0x10] sm:$0xff]
          %v2396 = vld [vmem:[%s18 + $0x18] sm:$0xff]
          %v2397 = vld [vmem:[%s18 + $0x20] sm:$0xff]
          %v2398 = vld [vmem:[%s18 + $0x28] sm:$0xff]
          %v2399 = vld [vmem:[%s18 + $0x30] sm:$0xff]
          %v2400 = vld [vmem:[%s18 + $0x38] sm:$0xff]
          %v2401 = vld [vmem:[%s18 + $0x40] sm:$0xff]
          %v2402 = vld [vmem:[%s18 + $0x48] sm:$0xff]
          %v2403 = vld [vmem:[%s18 + $0x50] sm:$0xff]
          %v2404 = vld [vmem:[%s18 + $0x58] sm:$0xff]
          %v2405 = vld [vmem:[%s18 + $0x60] sm:$0xff]
          %v2406 = vld [vmem:[%s18 + $0x68] sm:$0xff]
          %v2407 = vld [vmem:[%s18 + $0x70] sm:$0xff]
          %v2408 = vld [vmem:[%s18 + $0x78] sm:$0xff]
          %v2409 = vpack.c.bf16 %v2394, %v2393
          %v2410 = vpack.c.bf16 %v2396, %v2395
          %v2411 = vpack.c.bf16 %v2398, %v2397
          %v2412 = vpack.c.bf16 %v2400, %v2399
          %v2413 = vpack.c.bf16 %v2402, %v2401
          %v2414 = vpack.c.bf16 %v2404, %v2403
          %v2415 = vpack.c.bf16 %v2406, %v2405
          %v2416 = vpack.c.bf16 %v2408, %v2407
          %v2417 = vld [vmem:[%s19] sm:$0x1]
          %v2419 = vperm.slane %v2417, 0
          %2421 = vmatpush.bf16.msra.mxu0 %v2416
          %2422 = vmatpush.bf16.msra.mxu0 %v2415
          %2423 = vmatpush.bf16.msra.mxu0 %v2414
          %2424 = vmatpush.bf16.msra.mxu0 %v2413
          %2425 = vmatpush.bf16.msra.mxu0 %v2412
          %2426 = vmatpush.bf16.msra.mxu0 %v2411
          %2427 = vmatpush.bf16.msra.mxu0 %v2410
          %2428 = vmatpush.bf16.msra.mxu0 %v2409
          %2429 = vmatmul.bf16.gmra.mxu0 %v2392
          %v2430 = vpop.f32.mrf.mxu0
          %v2431 = vadd.f32 %v2419, %v2430
          %v2432 = vpop.f32.mrf.mxu0
          %2433 = vdwg.mxu0
          %vm2434 = vcmask 9216
          %2435 = vst.msk [vmem:[#allocation9] sm:$0x3] %vm2434, %v2431
        $region120: #{text_model_forward.1} parent=99 // pred_fallthru
          _
        // Predicated region
        $region121: #{text_model_forward.1} parent=99 // pred_check
          %p2436 = pneg %p531
        $region122: #{text_model_forward.1} parent=99 // pred_check_branch
          %2438 = sbr.rel (%p2436) target = $region124
        $region123: #{text_model_forward.1} parent=99 // pred_region
          %2440 = vsyncadd [#allocation5], 0
          %s2442 = sshll.u32 [#allocation9], 4
          %s2443 = int_to_ptr.vmem [resolvable:$true] %s2442
          %s2444 = sshll.u32 %s20, 4
          %s2445 = int_to_ptr.hbm [resolvable:$true] %s2444
          %2447 = dma.vmem_to_hbm [thread:$0]  %s2443, 32, %s2445, [#allocation5]
        $region124: #{text_model_forward.1} parent=99 // pred_fallthru
          _
        // Predicated region
        $region125: #{text_model_forward.1} parent=99 // pred_check
          %p2448 = pneg %p531
        $region126: #{text_model_forward.1} parent=99 // pred_check_branch
          %2450 = sbr.rel (%p2448) target = $region128
        $region127: #{text_model_forward.1} parent=99 // pred_region
          %2452 = dma.done [#allocation5], 32
        $region128: #{text_model_forward.1} parent=99 // pred_fallthru
          _
      $region100: #{text_model_forward.1} parent=5 // pred_fallthru
        _
      %p2453 = scmp.le.s32.totalorder 2, %s33
      // Predicated region
      $region129: #{text_model_forward.1} parent=5 // pred_check
        %p2454 = pneg %p2453
      $region130: #{text_model_forward.1} parent=5 // pred_check_branch
        %2456 = sbr.rel (%p2454) target = $region132
      $region131: #{text_model_forward.1} parent=5 // pred_region
        %s2457 = ssub.s32 %s33, 2
      $region132: #{text_model_forward.1} parent=5 // pred_fallthru
        _
    $region6: #{text_model_forward.1} parent=1 // loop_footer
      %s37 = sadd.s32 1, %s33
    $region7: #{text_model_forward.1} parent=1 // loop_footer_branch
      %32 = sbr.rel target = $region3
    $region8: #{text_model_forward.1} parent=1 // loop_exit
      _
    %2458 = vsyncpa [#allocation4], 1
    %s2459 = scalar_lea.sflag [#allocation4], 1
    %2460 = vsyncpa %s2459, 1
    %2461 = vsyncpa [#allocation7], 1
    %s2462 = scalar_lea.sflag [#allocation7], 1
    %2463 = vsyncpa %s2462, 1
    %2464 = vsyncpa [#allocation5], 1
    %s2465 = scalar_lea.sflag [#allocation5], 1
    %2466 = vsyncpa %s2465, 1

</llo_original>
